<compile_context>
chip_gen: v6e
topology: v6e:2x2x1
jax: 0.10.0
libtpu: 0.0.40
codegen_flags: <defaults>
</compile_context>

<pallas_src>
import functools

import jax
import jax.numpy as jnp
from jax import lax
from jax.experimental import pallas as pl
from jax.experimental.pallas import tpu as pltpu

_MIB = 1024 * 1024


def _reslayer_kernel(x_hbm, hmask_ref, lmask_ref, rmask_ref,
                     w1_ref, b1_ref, w2_ref, b2_ref, o_ref,
                     xbuf, sem, *, tile_h, width, rows_per_image):
    # x_hbm    : (N*(H+2)*W, Cp) f32 in HBM (pl.ANY), manually DMA'd per tile
    # hmask_ref: (1, R, 1)  f32, 0 on halo rows outside the image (per row-tile)
    # lmask_ref: (1, R, 1)  f32, 0 where (row % W) == W-1   (taps with kw == 0)
    # rmask_ref: (1, R, 1)  f32, 0 where (row % W) == 0     (taps with kw == 2)
    # w1_ref   : (Cp, Cmp)    bf16 folded 1x1 conv weight
    # b1_ref   : (1, Cmp)     f32 folded BN bias (layer1)
    # w2_ref   : (9*Cmp, Cp)  bf16 folded 3x3 conv weight, taps stacked k = kh*3+kw
    # b2_ref   : (1, Cp)      f32 folded BN bias (layer2)
    # o_ref    : (1, 1, PW, Cp) f32 output row-tile
    # xbuf     : (2, R, Cp) f32 VMEM double buffer; sem: DMA sems, one per slot
    R = (tile_h + 2) * width
    PW = tile_h * width
    Cmp = w1_ref.shape[1]

    n = pl.program_id(0)
    i = pl.program_id(1)
    nt = pl.num_programs(1)
    slot = i & 1

    def x_copy(tile_idx, s):
        start = pl.multiple_of(n * rows_per_image + tile_idx * PW, width)
        return pltpu.make_async_copy(
            x_hbm.at[pl.ds(start, R), :], xbuf.at[s], sem.at[s])

    # Prime the pipeline at the first tile of each image.
    @pl.when(i == 0)
    def _():
        x_copy(0, 0).start()

    # Wait for this tile's rows, then prefetch the next tile (same image)
    # into the other slot so its DMA overlaps with this tile's compute.
    x_copy(i, slot).wait()

    @pl.when(i + 1 < nt)
    def _():
        x_copy(i + 1, 1 - slot).start()

    x_tile = xbuf[slot]                                            # (R, Cp) f32

    # ---- layer1: 1x1 conv == channel matmul (bf16 operands, f32 acc) + bias + ReLU ----
    y1 = jnp.dot(x_tile.astype(jnp.bfloat16), w1_ref[...],
                 preferred_element_type=jnp.float32)               # (R, Cmp) f32
    y1 = jnp.maximum(y1 + b1_ref[...], 0.0)
    # Halo rows that are the 3x3 conv's SAME zero-padding must be 0, not relu(b1).
    y1 = y1 * hmask_ref[0]

    # ---- build the three column variants; only TWO rolls (XLU), then bf16 ----
    # Wrap-invariant (fragile, keep): only row 0 of a_l (reads y1_l[R-1], col W-1)
    # and row R-1 of a_r (reads y1_r[0], col 0) wrap, and both are zeroed by
    # lmask/rmask, so the circular rotate is exactly SAME zero padding.
    a_c = y1.astype(jnp.bfloat16)
    a_l = pltpu.roll(y1 * lmask_ref[0], shift=1, axis=0).astype(jnp.bfloat16)
    a_r = pltpu.roll(y1 * rmask_ref[0], shift=R - 1, axis=0).astype(jnp.bfloat16)

    # ---- layer2: 3x3 conv as 3 matmuls grouped by kh (K = 3*Cmp each) ----
    # Tap (kh, kw) slab == variant[kh*W : kh*W + PW]; slice starts kh*W are
    # sublane-aligned whenever W % 8 == 0 (perf only; correct for any W).
    acc = None
    for kh in range(3):
        base = kh * width
        grp = jnp.concatenate(
            [a_l[base:base + PW, :],
             a_c[base:base + PW, :],
             a_r[base:base + PW, :]], axis=1)                      # (PW, 3*Cmp) bf16
        w_grp = w2_ref[kh * 3 * Cmp:(kh + 1) * 3 * Cmp, :]          # (3*Cmp, Cp) bf16
        part = jnp.dot(grp, w_grp, preferred_element_type=jnp.float32)
        acc = part if acc is None else acc + part
    y2 = jnp.maximum(acc + b2_ref[...], 0.0)                       # (PW, Cp) f32

    # ---- residual add (center rows of the input tile, still in VMEM) ----
    o_ref[0, 0] = (x_tile[width:width + PW, :] + y2).astype(o_ref.dtype)


def _round_up(x, m):
    return (x + m - 1) // m * m


def _pick_tile_h(H, W, Cp, Cmp, budget_bytes, batch):
    """Largest tile_h dividing H whose per-step VMEM estimate fits the budget."""
    weights = 2 * (Cp * Cmp + 9 * Cmp * Cp) * 2 + 2 * (Cmp + Cp) * 4
    feas = []
    for th in range(1, H + 1):
        if H % th:
            continue
        R = (th + 2) * W
        PW = th * W
        est = (2 * R * Cp * 4          # x double-buffer scratch (f32)
               + 2 * PW * Cp * 4       # output block, double-buffered (f32)
               + R * Cmp * 4           # y1 (f32)
               + 2 * R * Cmp * 4       # rolled l/r variants before cast (f32)
               + 3 * R * Cmp * 2       # bf16 variants
               + PW * 3 * Cmp * 2      # one per-kh patch group (bf16)
               + 2 * PW * Cp * 4       # acc / y2 (f32)
               + weights)
        if est <= budget_bytes:
            feas.append(th)
    if not feas:
        return 1
    best = max(feas)
    # v7x megacore: prefer an even total grid so both TensorCores stay busy.
    if (batch * (H // best)) % 2 == 1:
        even = [t for t in feas if (batch * (H // t)) % 2 == 0]
        if even:
            best = max(even)
    return best


def res_layer_pallas(x_nchw, w1f, b1f, w2f, b2f, *, tile_h=None, interpret=False):
    """ResLayer forward, BN folded (eval mode). x_nchw: (N, C, H, W) float32."""
    N, C, H, W = x_nchw.shape
    Cmid = w1f.shape[0]
    assert w1f.shape == (Cmid, C, 1, 1) and w2f.shape == (C, Cmid, 3, 3)

    f32 = jnp.float32
    # Channel padding to lane-dense multiples of 128 (lane-dense matmuls + stores).
    Cp = max(128, _round_up(C, 128))
    Cmp = max(128, _round_up(Cmid, 128))

    # Per-generation VMEM plan: ~64 MiB on v5e/v6e (128 MiB phys), ~48 MiB on
    # v7x (64 MiB phys); tile selection leaves extra headroom under that limit.
    try:
        vmem_phys = pltpu.get_tpu_info().vmem_capacity_bytes
    except Exception:
        vmem_phys = 64 * _MIB
    vmem_limit = int(max(32 * _MIB, min(vmem_phys - 16 * _MIB, 64 * _MIB)))

    if tile_h is None:
        tile_h = _pick_tile_h(H, W, Cp, Cmp, int(0.55 * vmem_limit), N)
    assert H % tile_h == 0, "tile_h must divide H"
    num_tiles = H // tile_h
    R = (tile_h + 2) * W            # rows per input tile (1-row halo above/below)
    PW = tile_h * W                 # rows per output tile
    RT = (H + 2) * W                # padded rows per image

    # ---- input: NCHW -> NHWC, pad channels + one zero row top/bottom, flatten ----
    # (no halo gather: overlapping row-windows are DMA'd inside the kernel)
    x_nhwc = jnp.transpose(x_nchw, (0, 2, 3, 1)).astype(f32)            # (N, H, W, C)
    x_nhwc = jnp.pad(x_nhwc, ((0, 0), (1, 1), (0, 0), (0, Cp - C)))     # (N, H+2, W, Cp)
    x_flat = x_nhwc.reshape(N * RT, Cp)                                 # (N*(H+2)*W, Cp)

    # ---- weights (BN already folded): bf16 matmul operands, f32 biases ----
    w1_k = jnp.transpose(w1f[:, :, 0, 0], (1, 0))                       # (C, Cmid)
    w1_k = jnp.pad(w1_k, ((0, Cp - C), (0, Cmp - Cmid))).astype(jnp.bfloat16)
    b1_k = jnp.pad(b1f, (0, Cmp - Cmid)).astype(f32)[None, :]           # (1, Cmp)
    w2_k = jnp.transpose(w2f, (2, 3, 1, 0)).reshape(9, Cmid, C)         # taps k = kh*3+kw
    w2_k = jnp.pad(w2_k, ((0, 0), (0, Cmp - Cmid), (0, Cp - C)))
    w2_k = w2_k.reshape(9 * Cmp, Cp).astype(jnp.bfloat16)               # (9*Cmp, Cp)
    b2_k = jnp.pad(b2f, (0, Cp - C)).astype(f32)[None, :]               # (1, Cp)

    # ---- boundary masks, built host-side (no in-kernel iota / div / mod) ----
    r = jnp.arange(R)
    col = r % W
    lmask = (col != W - 1).astype(f32)[None, :, None]                   # (1, R, 1)
    rmask = (col != 0).astype(f32)[None, :, None]                       # (1, R, 1)
    grow = jnp.arange(num_tiles)[:, None] * tile_h + (r // W)[None, :] - 1
    hmask = ((grow >= 0) & (grow < H)).astype(f32)[:, :, None]          # (nt, R, 1)

    kernel = functools.partial(_reslayer_kernel, tile_h=tile_h, width=W,
                               rows_per_image=RT)
    out_tiles = pl.pallas_call(
        kernel,
        out_shape=jax.ShapeDtypeStruct((N, num_tiles, PW, Cp), f32),
        grid_spec=pltpu.PrefetchScalarGridSpec(
            num_scalar_prefetch=0,
            grid=(N, num_tiles),
            in_specs=[
                pl.BlockSpec(memory_space=pl.ANY),                        # x (HBM, manual DMA)
                pl.BlockSpec((1, R, 1), lambda n, i: (i, 0, 0)),          # hmask (per tile)
                pl.BlockSpec((1, R, 1), lambda n, i: (0, 0, 0)),          # lmask
                pl.BlockSpec((1, R, 1), lambda n, i: (0, 0, 0)),          # rmask
                pl.BlockSpec((Cp, Cmp), lambda n, i: (0, 0)),             # w1
                pl.BlockSpec((1, Cmp), lambda n, i: (0, 0)),              # b1
                pl.BlockSpec((9 * Cmp, Cp), lambda n, i: (0, 0)),         # w2
                pl.BlockSpec((1, Cp), lambda n, i: (0, 0)),               # b2
            ],
            out_specs=pl.BlockSpec((1, 1, PW, Cp), lambda n, i: (n, i, 0, 0)),
            scratch_shapes=[
                pltpu.VMEM((2, R, Cp), f32),          # x tile double buffer
                pltpu.SemaphoreType.DMA((2,)),        # one DMA sem per slot
            ],
        ),
        compiler_params=pltpu.CompilerParams(
            # row-tile axis carries the DMA double-buffer -> must stay in order.
            dimension_semantics=("parallel", "arbitrary"),
            vmem_limit_bytes=vmem_limit,
        ),
        interpret=interpret,
    )(x_flat, hmask, lmask, rmask, w1_k, b1_k, w2_k, b2_k)

    out = out_tiles.reshape(N, H, W, Cp)[:, :, :, :C]                   # un-tile, unpad C
    return jnp.transpose(out, (0, 3, 1, 2))                             # NHWC -> NCHW


def fold_bn(conv_w_oihw, gamma, beta, mean, var, eps=1e-5):
    """Fold BatchNorm (eval mode) into conv weight scale + per-channel bias."""
    scale = gamma / jnp.sqrt(var + eps)
    w = conv_w_oihw * scale[:, None, None, None]
    b = beta - mean * scale
    return w, b


def ref_forward(x_nchw, w1f, b1f, w2f, b2f):
    """Pure-JAX f32 reference (lax conv) with the same folded params."""
    dn = ("NCHW", "OIHW", "NCHW")
    y = lax.conv_general_dilated(x_nchw, w1f, (1, 1), "SAME",
                                 dimension_numbers=dn, precision=lax.Precision.HIGHEST)
    y = jnp.maximum(y + b1f[None, :, None, None], 0.0)
    y = lax.conv_general_dilated(y, w2f, (1, 1), "SAME",
                                 dimension_numbers=dn, precision=lax.Precision.HIGHEST)
    y = jnp.maximum(y + b2f[None, :, None, None], 0.0)
    return x_nchw + y


if __name__ == "__main__":
    key = jax.random.PRNGKey(0)
    N, C, H, W = 2, 4, 16, 16
    Cmid = C // 2

    keys = jax.random.split(key, 11)
    x_nchw = jax.random.normal(keys[0], (N, C, H, W), jnp.float32)

    # layer1: Conv2d(C, Cmid, k=1) + BN(Cmid) + ReLU
    w1_raw = jax.random.normal(keys[1], (Cmid, C, 1, 1), jnp.float32) * 0.3
    g1 = 1.0 + 0.1 * jax.random.normal(keys[2], (Cmid,), jnp.float32)
    bt1 = 0.1 * jax.random.normal(keys[3], (Cmid,), jnp.float32)
    m1 = 0.1 * jax.random.normal(keys[4], (Cmid,), jnp.float32)
    v1 = jnp.abs(1.0 + 0.1 * jax.random.normal(keys[5], (Cmid,), jnp.float32))

    # layer2: Conv2d(Cmid, C, k=3, pad=1) + BN(C) + ReLU
    w2_raw = jax.random.normal(keys[6], (C, Cmid, 3, 3), jnp.float32) * 0.3
    g2 = 1.0 + 0.1 * jax.random.normal(keys[7], (C,), jnp.float32)
    bt2 = 0.1 * jax.random.normal(keys[8], (C,), jnp.float32)
    m2 = 0.1 * jax.random.normal(keys[9], (C,), jnp.float32)
    v2 = jnp.abs(1.0 + 0.1 * jax.random.normal(keys[10], (C,), jnp.float32))

    w1f, b1f = fold_bn(w1_raw, g1, bt1, m1, v1)   # (Cmid, C, 1, 1), (Cmid,)
    w2f, b2f = fold_bn(w2_raw, g2, bt2, m2, v2)   # (C, Cmid, 3, 3), (C,)

    # tile_h=8 -> 2 row-tiles per image: exercises the halo / double-buffered DMA path.
    out = jax.block_until_ready(
        res_layer_pallas(x_nchw, w1f, b1f, w2f, b2f, tile_h=8))

    ref = ref_forward(x_nchw, w1f, b1f, w2f, b2f)

    assert out.shape == (N, C, H, W)
    max_err = float(jnp.max(jnp.abs(out - ref)))
    assert jnp.allclose(out, ref, atol=3e-2, rtol=3e-2), \
        f"mismatch vs reference, max abs err {max_err}"
    print("KERNEL_OK")
</pallas_src>

<mosaic_0001>
module attributes {stable_mosaic.version = 11 : i64} {
  func.func @_reslayer_kernel(%arg0: i32, %arg1: i32, %arg2: memref<576x128xf32, #tpu.memory_space<any>>, %arg3: memref<1x160x1xf32, #tpu.memory_space<vmem>>, %arg4: memref<1x160x1xf32, #tpu.memory_space<vmem>>, %arg5: memref<1x160x1xf32, #tpu.memory_space<vmem>>, %arg6: memref<128x128xbf16, #tpu.memory_space<vmem>>, %arg7: memref<1x128xf32, #tpu.memory_space<vmem>>, %arg8: memref<1152x128xbf16, #tpu.memory_space<vmem>>, %arg9: memref<1x128xf32, #tpu.memory_space<vmem>>, %arg10: memref<1x1x128x128xf32, #tpu.memory_space<vmem>>, %arg11: memref<2x160x128xf32, #tpu.memory_space<vmem>>, %arg12: memref<2x!tpu.dma_semaphore, #tpu.memory_space<semaphore_mem>>) attributes {dimension_semantics = [#tpu.dimension_semantics<parallel>, #tpu.dimension_semantics<arbitrary>], iteration_bounds = array<i64: 2, 2>, scalar_prefetch = 0 : i64, scratch_operands = 2 : i64, tpu.core_type = #tpu.core_type<tc>, window_params = [{}, {transform_indices = @transform_1, window_bounds = array<i64: 1, 160, 1>}, {pipeline_mode = #tpu.pipeline_mode<synchronous>, transform_indices = @transform_2, window_bounds = array<i64: 1, 160, 1>}, {pipeline_mode = #tpu.pipeline_mode<synchronous>, transform_indices = @transform_3, window_bounds = array<i64: 1, 160, 1>}, {pipeline_mode = #tpu.pipeline_mode<synchronous>, transform_indices = @transform_4, window_bounds = array<i64: 128, 128>}, {pipeline_mode = #tpu.pipeline_mode<synchronous>, transform_indices = @transform_5, window_bounds = array<i64: 1, 128>}, {pipeline_mode = #tpu.pipeline_mode<synchronous>, transform_indices = @transform_6, window_bounds = array<i64: 1152, 128>}, {pipeline_mode = #tpu.pipeline_mode<synchronous>, transform_indices = @transform_7, window_bounds = array<i64: 1, 128>}, {transform_indices = @transform_8, window_bounds = array<i64: 1, 1, 128, 128>}]} {
    %c1_i32 = arith.constant 1 : i32
    %0 = arith.andi %arg1, %c1_i32 : i32
    %c0_i32 = arith.constant 0 : i32
    %1 = arith.cmpi eq, %arg1, %c0_i32 : i32
    %2 = arith.extui %1 : i1 to i32
    %c0_i32_0 = arith.constant 0 : i32
    %3 = arith.cmpi ne, %2, %c0_i32_0 : i32
    scf.if %3 {
      %c288_i32_36 = arith.constant 288 : i32
      %75 = arith.muli %arg0, %c288_i32_36 : i32
      %c0_i32_37 = arith.constant 0 : i32
      %76 = arith.addi %75, %c0_i32_37 : i32
      %77 = tpu.assume_multiple %76, 16 : i32
      %c0_i32_38 = arith.constant 0 : i32
      %c0_i32_39 = arith.constant 0 : i32
      %c0_i32_40 = arith.constant 0 : i32
      %78 = tpu.memref_slice %arg2[%77, %c0_i32_40] : memref<576x128xf32, #tpu.memory_space<any>> -> memref<160x128xf32, #tpu.memory_space<any>>
      %c0_i32_41 = arith.constant 0 : i32
      %c0_i32_42 = arith.constant 0 : i32
      %79 = tpu.memref_slice %arg11[%c0_i32_38, %c0_i32_41, %c0_i32_42] : memref<2x160x128xf32, #tpu.memory_space<vmem>> -> memref<1x160x128xf32, #tpu.memory_space<vmem>>
      %80 = tpu.memref_squeeze %79 : memref<1x160x128xf32, #tpu.memory_space<vmem>> -> memref<160x128xf32, #tpu.memory_space<vmem>>
      %81 = tpu.memref_slice %arg12[%c0_i32_39] : memref<2x!tpu.dma_semaphore, #tpu.memory_space<semaphore_mem>> -> memref<1x!tpu.dma_semaphore, #tpu.memory_space<semaphore_mem>>
      %82 = tpu.memref_squeeze %81 : memref<1x!tpu.dma_semaphore, #tpu.memory_space<semaphore_mem>> -> memref<!tpu.dma_semaphore, #tpu.memory_space<semaphore_mem>>
      tpu.enqueue_dma source(%78 : memref<160x128xf32, #tpu.memory_space<any>>) target(%80 : memref<160x128xf32, #tpu.memory_space<vmem>>) target_semaphore(%82 : memref<!tpu.dma_semaphore, #tpu.memory_space<semaphore_mem>>)
    } else {
    }
    %c288_i32 = arith.constant 288 : i32
    %4 = arith.muli %arg0, %c288_i32 : i32
    %c128_i32 = arith.constant 128 : i32
    %5 = arith.muli %arg1, %c128_i32 : i32
    %6 = arith.addi %4, %5 : i32
    %7 = tpu.assume_multiple %6, 16 : i32
    %c0_i32_1 = arith.constant 0 : i32
    %8 = tpu.memref_slice %arg2[%7, %c0_i32_1] : memref<576x128xf32, #tpu.memory_space<any>> -> memref<160x128xf32, #tpu.memory_space<any>>
    %c0_i32_2 = arith.constant 0 : i32
    %c0_i32_3 = arith.constant 0 : i32
    %9 = tpu.memref_slice %arg11[%0, %c0_i32_2, %c0_i32_3] : memref<2x160x128xf32, #tpu.memory_space<vmem>> -> memref<1x160x128xf32, #tpu.memory_space<vmem>>
    %10 = tpu.memref_squeeze %9 : memref<1x160x128xf32, #tpu.memory_space<vmem>> -> memref<160x128xf32, #tpu.memory_space<vmem>>
    %11 = tpu.memref_slice %arg12[%0] : memref<2x!tpu.dma_semaphore, #tpu.memory_space<semaphore_mem>> -> memref<1x!tpu.dma_semaphore, #tpu.memory_space<semaphore_mem>>
    %12 = tpu.memref_squeeze %11 : memref<1x!tpu.dma_semaphore, #tpu.memory_space<semaphore_mem>> -> memref<!tpu.dma_semaphore, #tpu.memory_space<semaphore_mem>>
    tpu.wait_dma2 semaphore(%12 : memref<!tpu.dma_semaphore, #tpu.memory_space<semaphore_mem>>) src(%8 : memref<160x128xf32, #tpu.memory_space<any>>) dst(%10 : memref<160x128xf32, #tpu.memory_space<vmem>>)
    %c1_i32_4 = arith.constant 1 : i32
    %13 = arith.addi %arg1, %c1_i32_4 : i32
    %c2_i32 = arith.constant 2 : i32
    %14 = arith.cmpi slt, %13, %c2_i32 : i32
    %15 = arith.extui %14 : i1 to i32
    %c0_i32_5 = arith.constant 0 : i32
    %16 = arith.cmpi ne, %15, %c0_i32_5 : i32
    scf.if %16 {
      %c1_i32_36 = arith.constant 1 : i32
      %75 = arith.addi %arg1, %c1_i32_36 : i32
      %c1_i32_37 = arith.constant 1 : i32
      %76 = arith.subi %c1_i32_37, %0 : i32
      %c288_i32_38 = arith.constant 288 : i32
      %77 = arith.muli %arg0, %c288_i32_38 : i32
      %c128_i32_39 = arith.constant 128 : i32
      %78 = arith.muli %75, %c128_i32_39 : i32
      %79 = arith.addi %77, %78 : i32
      %80 = tpu.assume_multiple %79, 16 : i32
      %c0_i32_40 = arith.constant 0 : i32
      %81 = tpu.memref_slice %arg2[%80, %c0_i32_40] : memref<576x128xf32, #tpu.memory_space<any>> -> memref<160x128xf32, #tpu.memory_space<any>>
      %c0_i32_41 = arith.constant 0 : i32
      %c0_i32_42 = arith.constant 0 : i32
      %82 = tpu.memref_slice %arg11[%76, %c0_i32_41, %c0_i32_42] : memref<2x160x128xf32, #tpu.memory_space<vmem>> -> memref<1x160x128xf32, #tpu.memory_space<vmem>>
      %83 = tpu.memref_squeeze %82 : memref<1x160x128xf32, #tpu.memory_space<vmem>> -> memref<160x128xf32, #tpu.memory_space<vmem>>
      %84 = tpu.memref_slice %arg12[%76] : memref<2x!tpu.dma_semaphore, #tpu.memory_space<semaphore_mem>> -> memref<1x!tpu.dma_semaphore, #tpu.memory_space<semaphore_mem>>
      %85 = tpu.memref_squeeze %84 : memref<1x!tpu.dma_semaphore, #tpu.memory_space<semaphore_mem>> -> memref<!tpu.dma_semaphore, #tpu.memory_space<semaphore_mem>>
      tpu.enqueue_dma source(%81 : memref<160x128xf32, #tpu.memory_space<any>>) target(%83 : memref<160x128xf32, #tpu.memory_space<vmem>>) target_semaphore(%85 : memref<!tpu.dma_semaphore, #tpu.memory_space<semaphore_mem>>)
    } else {
    }
    %17 = arith.index_cast %0 : i32 to index
    %c0 = arith.constant 0 : index
    %c0_6 = arith.constant 0 : index
    %18 = vector.load %arg11[%17, %c0, %c0_6] : memref<2x160x128xf32, #tpu.memory_space<vmem>>, vector<1x160x128xf32>
    %19 = vector.shape_cast %18 : vector<1x160x128xf32> to vector<160x128xf32>
    %20 = arith.truncf %19 : vector<160x128xf32> to vector<160x128xbf16>
    %c0_7 = arith.constant 0 : index
    %c0_8 = arith.constant 0 : index
    %21 = vector.load %arg6[%c0_7, %c0_8] : memref<128x128xbf16, #tpu.memory_space<vmem>>, vector<128x128xbf16>
    %cst = arith.constant dense<0.000000e+00> : vector<160x128xf32>
    %22 = tpu.matmul %20, %21, %cst {dimension_numbers = #tpu.dot_dimension_numbers<[1], [0], [0], [1], [0, 0, 1, 1], [], []>} : vector<160x128xbf16>, vector<128x128xbf16>, vector<160x128xf32> -> vector<160x128xf32>
    %c0_9 = arith.constant 0 : index
    %c0_10 = arith.constant 0 : index
    %23 = vector.load %arg7[%c0_9, %c0_10] : memref<1x128xf32, #tpu.memory_space<vmem>>, vector<1x128xf32>
    %24 = vector.broadcast %23 : vector<1x128xf32> to vector<160x128xf32>
    %25 = arith.addf %22, %24 : vector<160x128xf32>
    %cst_11 = arith.constant 0.000000e+00 : f32
    %26 = vector.broadcast %cst_11 : f32 to vector<160x128xf32>
    %27 = arith.maximumf %25, %26 : vector<160x128xf32>
    %c0_12 = arith.constant 0 : index
    %c0_13 = arith.constant 0 : index
    %c0_14 = arith.constant 0 : index
    %28 = vector.load %arg3[%c0_12, %c0_13, %c0_14] : memref<1x160x1xf32, #tpu.memory_space<vmem>>, vector<1x160x1xf32>
    %29 = vector.shape_cast %28 : vector<1x160x1xf32> to vector<160x1xf32>
    %30 = vector.broadcast %29 : vector<160x1xf32> to vector<160x128xf32>
    %31 = arith.mulf %27, %30 : vector<160x128xf32>
    %32 = arith.truncf %31 : vector<160x128xf32> to vector<160x128xbf16>
    %c0_15 = arith.constant 0 : index
    %c0_16 = arith.constant 0 : index
    %c0_17 = arith.constant 0 : index
    %33 = vector.load %arg4[%c0_15, %c0_16, %c0_17] : memref<1x160x1xf32, #tpu.memory_space<vmem>>, vector<1x160x1xf32>
    %34 = vector.shape_cast %33 : vector<1x160x1xf32> to vector<160x1xf32>
    %35 = vector.broadcast %34 : vector<160x1xf32> to vector<160x128xf32>
    %36 = arith.mulf %31, %35 : vector<160x128xf32>
    %c1_i32_18 = arith.constant 1 : i32
    %37 = tpu.dynamic_rotate %36 by %c1_i32_18 dim 0 : vector<160x128xf32>, i32 -> vector<160x128xf32>
    %38 = arith.truncf %37 : vector<160x128xf32> to vector<160x128xbf16>
    %c0_19 = arith.constant 0 : index
    %c0_20 = arith.constant 0 : index
    %c0_21 = arith.constant 0 : index
    %39 = vector.load %arg5[%c0_19, %c0_20, %c0_21] : memref<1x160x1xf32, #tpu.memory_space<vmem>>, vector<1x160x1xf32>
    %40 = vector.shape_cast %39 : vector<1x160x1xf32> to vector<160x1xf32>
    %41 = vector.broadcast %40 : vector<160x1xf32> to vector<160x128xf32>
    %42 = arith.mulf %31, %41 : vector<160x128xf32>
    %c159_i32 = arith.constant 159 : i32
    %43 = tpu.dynamic_rotate %42 by %c159_i32 dim 0 : vector<160x128xf32>, i32 -> vector<160x128xf32>
    %44 = arith.truncf %43 : vector<160x128xf32> to vector<160x128xbf16>
    %45 = vector.extract_strided_slice %38 {offsets = [0, 0], sizes = [128, 128], strides = [1, 1]} : vector<160x128xbf16> to vector<128x128xbf16>
    %46 = vector.extract_strided_slice %32 {offsets = [0, 0], sizes = [128, 128], strides = [1, 1]} : vector<160x128xbf16> to vector<128x128xbf16>
    %47 = vector.extract_strided_slice %44 {offsets = [0, 0], sizes = [128, 128], strides = [1, 1]} : vector<160x128xbf16> to vector<128x128xbf16>
    %48 = tpu.concatenate %45, %46, %47 in 1 : vector<128x128xbf16>, vector<128x128xbf16>, vector<128x128xbf16> -> vector<128x384xbf16>
    %c0_22 = arith.constant 0 : index
    %c0_23 = arith.constant 0 : index
    %49 = vector.load %arg8[%c0_22, %c0_23] : memref<1152x128xbf16, #tpu.memory_space<vmem>>, vector<384x128xbf16>
    %cst_24 = arith.constant dense<0.000000e+00> : vector<128x128xf32>
    %50 = tpu.matmul %48, %49, %cst_24 {dimension_numbers = #tpu.dot_dimension_numbers<[1], [0], [0], [1], [0, 0, 1, 1], [], []>} : vector<128x384xbf16>, vector<384x128xbf16>, vector<128x128xf32> -> vector<128x128xf32>
    %51 = vector.extract_strided_slice %38 {offsets = [16, 0], sizes = [128, 128], strides = [1, 1]} : vector<160x128xbf16> to vector<128x128xbf16>
    %52 = vector.extract_strided_slice %32 {offsets = [16, 0], sizes = [128, 128], strides = [1, 1]} : vector<160x128xbf16> to vector<128x128xbf16>
    %53 = vector.extract_strided_slice %44 {offsets = [16, 0], sizes = [128, 128], strides = [1, 1]} : vector<160x128xbf16> to vector<128x128xbf16>
    %54 = tpu.concatenate %51, %52, %53 in 1 : vector<128x128xbf16>, vector<128x128xbf16>, vector<128x128xbf16> -> vector<128x384xbf16>
    %c384 = arith.constant 384 : index
    %c0_25 = arith.constant 0 : index
    %55 = vector.load %arg8[%c384, %c0_25] : memref<1152x128xbf16, #tpu.memory_space<vmem>>, vector<384x128xbf16>
    %cst_26 = arith.constant dense<0.000000e+00> : vector<128x128xf32>
    %56 = tpu.matmul %54, %55, %cst_26 {dimension_numbers = #tpu.dot_dimension_numbers<[1], [0], [0], [1], [0, 0, 1, 1], [], []>} : vector<128x384xbf16>, vector<384x128xbf16>, vector<128x128xf32> -> vector<128x128xf32>
    %57 = arith.addf %50, %56 : vector<128x128xf32>
    %58 = vector.extract_strided_slice %38 {offsets = [32, 0], sizes = [128, 128], strides = [1, 1]} : vector<160x128xbf16> to vector<128x128xbf16>
    %59 = vector.extract_strided_slice %32 {offsets = [32, 0], sizes = [128, 128], strides = [1, 1]} : vector<160x128xbf16> to vector<128x128xbf16>
    %60 = vector.extract_strided_slice %44 {offsets = [32, 0], sizes = [128, 128], strides = [1, 1]} : vector<160x128xbf16> to vector<128x128xbf16>
    %61 = tpu.concatenate %58, %59, %60 in 1 : vector<128x128xbf16>, vector<128x128xbf16>, vector<128x128xbf16> -> vector<128x384xbf16>
    %c768 = arith.constant 768 : index
    %c0_27 = arith.constant 0 : index
    %62 = vector.load %arg8[%c768, %c0_27] : memref<1152x128xbf16, #tpu.memory_space<vmem>>, vector<384x128xbf16>
    %cst_28 = arith.constant dense<0.000000e+00> : vector<128x128xf32>
    %63 = tpu.matmul %61, %62, %cst_28 {dimension_numbers = #tpu.dot_dimension_numbers<[1], [0], [0], [1], [0, 0, 1, 1], [], []>} : vector<128x384xbf16>, vector<384x128xbf16>, vector<128x128xf32> -> vector<128x128xf32>
    %64 = arith.addf %57, %63 : vector<128x128xf32>
    %c0_29 = arith.constant 0 : index
    %c0_30 = arith.constant 0 : index
    %65 = vector.load %arg9[%c0_29, %c0_30] : memref<1x128xf32, #tpu.memory_space<vmem>>, vector<1x128xf32>
    %66 = vector.broadcast %65 : vector<1x128xf32> to vector<128x128xf32>
    %67 = arith.addf %64, %66 : vector<128x128xf32>
    %cst_31 = arith.constant 0.000000e+00 : f32
    %68 = vector.broadcast %cst_31 : f32 to vector<128x128xf32>
    %69 = arith.maximumf %67, %68 : vector<128x128xf32>
    %70 = vector.extract_strided_slice %19 {offsets = [16, 0], sizes = [128, 128], strides = [1, 1]} : vector<160x128xf32> to vector<128x128xf32>
    %71 = arith.addf %70, %69 : vector<128x128xf32>
    %c0_32 = arith.constant 0 : index
    %c0_33 = arith.constant 0 : index
    %c0_34 = arith.constant 0 : index
    %c0_35 = arith.constant 0 : index
    %72 = vector.load %arg10[%c0_32, %c0_33, %c0_34, %c0_35] : memref<1x1x128x128xf32, #tpu.memory_space<vmem>>, vector<1x1x128x128xf32>
    %73 = vector.shape_cast %72 : vector<1x1x128x128xf32> to vector<128x128xf32>
    %74 = vector.shape_cast %71 : vector<128x128xf32> to vector<1x1x128x128xf32>
    tpu.vector_store %arg10[%c0_32, %c0_33, %c0_34, %c0_35], %74 {strides = array<i32>} : memref<1x1x128x128xf32, #tpu.memory_space<vmem>>, vector<1x1x128x128xf32>,
    return
  }
  func.func @transform_1(%arg0: i32, %arg1: i32) -> (i32, i32, i32) {
    %c0_i32 = arith.constant 0 : i32
    %c0_i32_0 = arith.constant 0 : i32
    %c0_i32_1 = arith.constant 0 : i32
    return %arg1, %c0_i32, %c0_i32_0 : i32, i32, i32
  }
  func.func @transform_2(%arg0: i32, %arg1: i32) -> (i32, i32, i32) {
    %c0_i32 = arith.constant 0 : i32
    %c0_i32_0 = arith.constant 0 : i32
    %c0_i32_1 = arith.constant 0 : i32
    %c0_i32_2 = arith.constant 0 : i32
    return %c0_i32, %c0_i32_0, %c0_i32_1 : i32, i32, i32
  }
  func.func @transform_3(%arg0: i32, %arg1: i32) -> (i32, i32, i32) {
    %c0_i32 = arith.constant 0 : i32
    %c0_i32_0 = arith.constant 0 : i32
    %c0_i32_1 = arith.constant 0 : i32
    %c0_i32_2 = arith.constant 0 : i32
    return %c0_i32, %c0_i32_0, %c0_i32_1 : i32, i32, i32
  }
  func.func @transform_4(%arg0: i32, %arg1: i32) -> (i32, i32) {
    %c0_i32 = arith.constant 0 : i32
    %c0_i32_0 = arith.constant 0 : i32
    %c0_i32_1 = arith.constant 0 : i32
    return %c0_i32, %c0_i32_0 : i32, i32
  }
  func.func @transform_5(%arg0: i32, %arg1: i32) -> (i32, i32) {
    %c0_i32 = arith.constant 0 : i32
    %c0_i32_0 = arith.constant 0 : i32
    %c0_i32_1 = arith.constant 0 : i32
    return %c0_i32, %c0_i32_0 : i32, i32
  }
  func.func @transform_6(%arg0: i32, %arg1: i32) -> (i32, i32) {
    %c0_i32 = arith.constant 0 : i32
    %c0_i32_0 = arith.constant 0 : i32
    %c0_i32_1 = arith.constant 0 : i32
    return %c0_i32, %c0_i32_0 : i32, i32
  }
  func.func @transform_7(%arg0: i32, %arg1: i32) -> (i32, i32) {
    %c0_i32 = arith.constant 0 : i32
    %c0_i32_0 = arith.constant 0 : i32
    %c0_i32_1 = arith.constant 0 : i32
    return %c0_i32, %c0_i32_0 : i32, i32
  }
  func.func @transform_8(%arg0: i32, %arg1: i32) -> (i32, i32, i32, i32) {
    %c0_i32 = arith.constant 0 : i32
    %c0_i32_0 = arith.constant 0 : i32
    %c0_i32_1 = arith.constant 0 : i32
    return %arg0, %arg1, %c0_i32, %c0_i32_0 : i32, i32, i32, i32
  }
}

</mosaic_0001>

<llo_original>
// kernel: tpu_custom_call.1
$region0: #{tpu_custom_call.1}
  #allocation0 [shape = 'u32[]', space=smem, size = 0x4, offset = 0x4, fixed_abs, tag = 'smem constant byte address 0x4 - core index']
  #allocation1 [shape = 'u32[144,128]{1,0:T(1,128)}', space=vmem, size = 0x12000, scoped, tag = 'internal scratch']
  #allocation2 [shape = 'f32[2,160,128]{2,1,0:T(8,128)}', space=vmem, size = 0x28000, scoped, tag = 'scratch operand']
  #allocation3 [shape = 's32[2]{0}', space=sflag, size = 0x8, scoped, tag = 'scratch operand']
  #allocation8 [shape = 's32[]', space=sflag, size = 0x4, offset = 0, fixed_abs, tag = 'sflag constant byte address 0x0 - dummy sync flag']
  #allocation9 [shape = 's32[]', space=sflag, size = 0x4, offset = 0, fixed_abs, tag = 'sflag constant byte address 0x0 - dummy sync flag']
  %s0 = inlined_call_operand.vmem [shape: f32[576,128], index: 0, kind: input, shape index: {}]
  %s1 = inlined_call_operand.vmem [shape: f32[2,160,1], index: 1, kind: input, shape index: {}]
  %s2 = inlined_call_operand.vmem [shape: f32[1,160,1], index: 2, kind: input, shape index: {}]
  %s3 = inlined_call_operand.vmem [shape: f32[1,160,1], index: 3, kind: input, shape index: {}]
  %s4 = inlined_call_operand.vmem [shape: bf16[128,128], index: 4, kind: input, shape index: {}]
  %s5 = inlined_call_operand.vmem [shape: f32[1,128], index: 5, kind: input, shape index: {}]
  %s6 = inlined_call_operand.hbm [shape: bf16[1152,128], index: 6, kind: input, shape index: {}]
  %s7 = inlined_call_operand.vmem [shape: f32[1,128], index: 7, kind: input, shape index: {}]
  %s8 = inlined_call_operand.hbm [shape: f32[2,2,128,128], index: 8, kind: output, shape index: {}]
  %s9 = sld [smem:[#allocation0]]
  $region141: #{tpu_custom_call.1} parent=0
    _
  %s11 = ssub.s32 1, %s9
  %s12 = scalar_select 0, %s11, %s9
  $region1: #{tpu_custom_call.1} parent=0
    #allocation4 [shape = 'u8[294912]{0}', space=vmem, size = 0x48000, scoped, tag = 'input window, operand 6, single buffered']
    #allocation5 [shape = 's32[2]{0}', space=sflag, size = 0x8, scoped, tag = 'scoped memory for tpu_custom_call.1']
    #allocation6 [shape = 's32[2]{0}', space=sflag, size = 0x8, scoped, tag = 'scoped memory for tpu_custom_call.1']
    #allocation7 [shape = 'u8[131072]{0}', space=vmem, size = 0x20000, scoped, tag = 'output window, operand 0']
    %13 = vsyncpa [#allocation5], 0
    %14 = vsyncpa [#allocation6], 0
    %s15 = scalar_lea.sflag [#allocation6], 1
    %16 = vsyncpa %s15, 0
    loop: start=0, step=1, limit=6
    $region2: #{tpu_custom_call.1} parent=1 // loop_pre_header
      _
    $region3: #{tpu_custom_call.1} parent=1 // loop_header
      %s18 = sphi 0, %s22
      %p19 = scmp.ge.s32.totalorder %s18, 6
      %s25 = sphi 0, %s37
      %s26 = sphi 0, %s33
      %s27 = sphi 0, %s25
      %s28 = sphi 0, %s26
      %s29 = sphi 0, %s27
      %s30 = sphi 0, %s28
      %s40 = sphi 0, %s42
      %s43 = sphi 0, %s40
      %s44 = sphi 0, %s43
      %s60 = sphi 0, %s44
      %s64 = sphi 0, %s64
      %s66 = sphi 0, %s64
      %s67 = sphi 0, %s66
      %s81 = sphi 0, %s67
      %s85 = sphi 0, %s85
      %s87 = sphi 0, %s85
      %s88 = sphi 0, %s87
      %s102 = sphi 0, %s88
      %s106 = sphi 0, %s106
      %s108 = sphi 0, %s106
      %s109 = sphi 0, %s108
      %s123 = sphi 0, %s109
      %s127 = sphi 0, %s127
      %s129 = sphi 0, %s127
      %s130 = sphi 0, %s129
      %s144 = sphi 0, %s130
      %s148 = sphi 0, %s148
      %s150 = sphi 0, %s148
      %s151 = sphi 0, %s150
      %s165 = sphi 0, %s151
      %s169 = sphi 0, %s169
      %s171 = sphi 0, %s169
      %s172 = sphi 0, %s171
      %s186 = sphi 0, %s172
      %s194 = sphi 0, %s196
      %s197 = sphi 0, %s194
      %s198 = sphi 0, %s197
      %s214 = sphi 0, %s198
    $region4: #{tpu_custom_call.1} parent=1 // loop_header_branch
      %21 = sbr.rel (%p19) target = $region8
    $region5: #{tpu_custom_call.1} parent=1 // loop_body
      %s23 = ssub.s32 %s18, 1
      %s24 = ssub.s32 %s18, 2
      %s31 = sadd.s32 1, %s26
      %p32 = scmp.ge.s32.totalorder %s31, 2
      %s33 = scalar_select %p32, 0, %s31
      %s34 = sadd.s32 1, %s25
      %s35 = scalar_select %p32, %s34, %s25
      %p36 = scmp.ge.s32.totalorder %s35, 2
      %s37 = scalar_select %p36, 0, %s35
      %s38 = ssub.s32 %s26, %s33
      %p39 = scmp.eq.s32.totalorder %s38, 0
      %s41 = sadd.s32 %s40, 1
      %s42 = scalar_select %p39, %s40, %s41
      %p45 = pneg %p39
      %p46 = scmp.eq.s32.totalorder %s18, 3
      %p47 = por %p45, %p46
      %p48 = scmp.ne.s32.totalorder %s40, %s43
      %p49 = scmp.eq.s32.totalorder %s18, 0
      %p50 = por %p48, %p49
      %p51 = scmp.ne.s32.totalorder %s40, %s43
      %p52 = scmp.eq.s32.totalorder %s23, 3
      %p53 = por %p51, %p52
      %p54 = scmp.ne.s32.totalorder %s43, %s44
      %p55 = scmp.eq.s32.totalorder %s23, 0
      %p56 = por %p54, %p55
      %p57 = scmp.ne.s32.totalorder %s43, %s44
      %p58 = scmp.eq.s32.totalorder %s24, 3
      %p59 = por %p57, %p58
      %p61 = scmp.ne.s32.totalorder %s44, %s60
      %p62 = scmp.eq.s32.totalorder %s24, 0
      %p63 = por %p61, %p62
      %s65 = sadd.s32 %s64, 1
      %p68 = scmp.eq.s32.totalorder %s18, 3
      %p69 = scmp.ne.s32.totalorder %s64, %s66
      %p70 = scmp.eq.s32.totalorder %s18, 0
      %p71 = por %p69, %p70
      %p72 = scmp.ne.s32.totalorder %s64, %s66
      %p73 = scmp.eq.s32.totalorder %s23, 3
      %p74 = por %p72, %p73
      %p75 = scmp.ne.s32.totalorder %s66, %s67
      %p76 = scmp.eq.s32.totalorder %s23, 0
      %p77 = por %p75, %p76
      %p78 = scmp.ne.s32.totalorder %s66, %s67
      %p79 = scmp.eq.s32.totalorder %s24, 3
      %p80 = por %p78, %p79
      %p82 = scmp.ne.s32.totalorder %s67, %s81
      %p83 = scmp.eq.s32.totalorder %s24, 0
      %p84 = por %p82, %p83
      %s86 = sadd.s32 %s85, 1
      %p89 = scmp.eq.s32.totalorder %s18, 3
      %p90 = scmp.ne.s32.totalorder %s85, %s87
      %p91 = scmp.eq.s32.totalorder %s18, 0
      %p92 = por %p90, %p91
      %p93 = scmp.ne.s32.totalorder %s85, %s87
      %p94 = scmp.eq.s32.totalorder %s23, 3
      %p95 = por %p93, %p94
      %p96 = scmp.ne.s32.totalorder %s87, %s88
      %p97 = scmp.eq.s32.totalorder %s23, 0
      %p98 = por %p96, %p97
      %p99 = scmp.ne.s32.totalorder %s87, %s88
      %p100 = scmp.eq.s32.totalorder %s24, 3
      %p101 = por %p99, %p100
      %p103 = scmp.ne.s32.totalorder %s88, %s102
      %p104 = scmp.eq.s32.totalorder %s24, 0
      %p105 = por %p103, %p104
      %s107 = sadd.s32 %s106, 1
      %p110 = scmp.eq.s32.totalorder %s18, 3
      %p111 = scmp.ne.s32.totalorder %s106, %s108
      %p112 = scmp.eq.s32.totalorder %s18, 0
      %p113 = por %p111, %p112
      %p114 = scmp.ne.s32.totalorder %s106, %s108
      %p115 = scmp.eq.s32.totalorder %s23, 3
      %p116 = por %p114, %p115
      %p117 = scmp.ne.s32.totalorder %s108, %s109
      %p118 = scmp.eq.s32.totalorder %s23, 0
      %p119 = por %p117, %p118
      %p120 = scmp.ne.s32.totalorder %s108, %s109
      %p121 = scmp.eq.s32.totalorder %s24, 3
      %p122 = por %p120, %p121
      %p124 = scmp.ne.s32.totalorder %s109, %s123
      %p125 = scmp.eq.s32.totalorder %s24, 0
      %p126 = por %p124, %p125
      %s128 = sadd.s32 %s127, 1
      %p131 = scmp.eq.s32.totalorder %s18, 3
      %p132 = scmp.ne.s32.totalorder %s127, %s129
      %p133 = scmp.eq.s32.totalorder %s18, 0
      %p134 = por %p132, %p133
      %p135 = scmp.ne.s32.totalorder %s127, %s129
      %p136 = scmp.eq.s32.totalorder %s23, 3
      %p137 = por %p135, %p136
      %p138 = scmp.ne.s32.totalorder %s129, %s130
      %p139 = scmp.eq.s32.totalorder %s23, 0
      %p140 = por %p138, %p139
      %p141 = scmp.ne.s32.totalorder %s129, %s130
      %p142 = scmp.eq.s32.totalorder %s24, 3
      %p143 = por %p141, %p142
      %p145 = scmp.ne.s32.totalorder %s130, %s144
      %p146 = scmp.eq.s32.totalorder %s24, 0
      %p147 = por %p145, %p146
      %s149 = sadd.s32 %s148, 1
      %p152 = scmp.eq.s32.totalorder %s18, 3
      %p153 = scmp.ne.s32.totalorder %s148, %s150
      %p154 = scmp.eq.s32.totalorder %s18, 0
      %p155 = por %p153, %p154
      %p156 = scmp.ne.s32.totalorder %s148, %s150
      %p157 = scmp.eq.s32.totalorder %s23, 3
      %p158 = por %p156, %p157
      %p159 = scmp.ne.s32.totalorder %s150, %s151
      %p160 = scmp.eq.s32.totalorder %s23, 0
      %p161 = por %p159, %p160
      %p162 = scmp.ne.s32.totalorder %s150, %s151
      %p163 = scmp.eq.s32.totalorder %s24, 3
      %p164 = por %p162, %p163
      %p166 = scmp.ne.s32.totalorder %s151, %s165
      %p167 = scmp.eq.s32.totalorder %s24, 0
      %p168 = por %p166, %p167
      %s170 = sadd.s32 %s169, 1
      %p173 = scmp.eq.s32.totalorder %s18, 3
      %p174 = scmp.ne.s32.totalorder %s169, %s171
      %p175 = scmp.eq.s32.totalorder %s18, 0
      %p176 = por %p174, %p175
      %p177 = scmp.ne.s32.totalorder %s169, %s171
      %p178 = scmp.eq.s32.totalorder %s23, 3
      %p179 = por %p177, %p178
      %p180 = scmp.ne.s32.totalorder %s171, %s172
      %p181 = scmp.eq.s32.totalorder %s23, 0
      %p182 = por %p180, %p181
      %p183 = scmp.ne.s32.totalorder %s171, %s172
      %p184 = scmp.eq.s32.totalorder %s24, 3
      %p185 = por %p183, %p184
      %p187 = scmp.ne.s32.totalorder %s172, %s186
      %p188 = scmp.eq.s32.totalorder %s24, 0
      %p189 = por %p187, %p188
      %s190 = ssub.s32 %s25, %s37
      %s191 = ssub.s32 %s26, %s33
      %s192 = sor.u32 %s190, %s191
      %p193 = scmp.eq.s32.totalorder %s192, 0
      %s195 = sadd.s32 %s194, 1
      %s196 = scalar_select %p193, %s194, %s195
      %p199 = pneg %p193
      %p200 = scmp.eq.s32.totalorder %s18, 3
      %p201 = por %p199, %p200
      %p202 = scmp.ne.s32.totalorder %s194, %s197
      %p203 = scmp.eq.s32.totalorder %s18, 0
      %p204 = por %p202, %p203
      %p205 = scmp.ne.s32.totalorder %s194, %s197
      %p206 = scmp.eq.s32.totalorder %s23, 3
      %p207 = por %p205, %p206
      %p208 = scmp.ne.s32.totalorder %s197, %s198
      %p209 = scmp.eq.s32.totalorder %s23, 0
      %p210 = por %p208, %p209
      %p211 = scmp.ne.s32.totalorder %s197, %s198
      %p212 = scmp.eq.s32.totalorder %s24, 3
      %p213 = por %p211, %p212
      %p215 = scmp.ne.s32.totalorder %s198, %s214
      %p216 = scmp.eq.s32.totalorder %s24, 0
      %p217 = por %p215, %p216
      %p218 = scmp.le.s32.totalorder 1, %s18
      %p219 = scmp.lt.s32.totalorder %s18, 5
      %p220 = pnand %p218, %p219
      %p221 = pneg %p220
      // Predicated region
      $region9: #{tpu_custom_call.1} parent=5 // pred_check
        _
      $region10: #{tpu_custom_call.1} parent=5 // pred_check_branch
        %223 = sbr.rel (%p220) target = $region12
      $region11: #{tpu_custom_call.1} parent=5 // pred_region
        %s224 = ssub.s32 %s18, 1
        // Predicated region
        $region13: #{tpu_custom_call.1} parent=11 // pred_check
          %p225 = pneg %p77
        $region14: #{tpu_custom_call.1} parent=11 // pred_check_branch
          %227 = sbr.rel (%p225) target = $region16
        $region15: #{tpu_custom_call.1} parent=11 // pred_region
          _
        $region16: #{tpu_custom_call.1} parent=11 // pred_fallthru
          _
        // Predicated region
        $region17: #{tpu_custom_call.1} parent=11 // pred_check
          %p228 = pneg %p98
        $region18: #{tpu_custom_call.1} parent=11 // pred_check_branch
          %230 = sbr.rel (%p228) target = $region20
        $region19: #{tpu_custom_call.1} parent=11 // pred_region
          _
        $region20: #{tpu_custom_call.1} parent=11 // pred_fallthru
          _
        // Predicated region
        $region21: #{tpu_custom_call.1} parent=11 // pred_check
          %p231 = pneg %p119
        $region22: #{tpu_custom_call.1} parent=11 // pred_check_branch
          %233 = sbr.rel (%p231) target = $region24
        $region23: #{tpu_custom_call.1} parent=11 // pred_region
          _
        $region24: #{tpu_custom_call.1} parent=11 // pred_fallthru
          _
        // Predicated region
        $region25: #{tpu_custom_call.1} parent=11 // pred_check
          %p234 = pneg %p140
        $region26: #{tpu_custom_call.1} parent=11 // pred_check_branch
          %236 = sbr.rel (%p234) target = $region28
        $region27: #{tpu_custom_call.1} parent=11 // pred_region
          _
        $region28: #{tpu_custom_call.1} parent=11 // pred_fallthru
          _
        // Predicated region
        $region29: #{tpu_custom_call.1} parent=11 // pred_check
          %p237 = pneg %p161
        $region30: #{tpu_custom_call.1} parent=11 // pred_check_branch
          %239 = sbr.rel (%p237) target = $region32
        $region31: #{tpu_custom_call.1} parent=11 // pred_region
          %s241 = ssub.s32 9216, 9216
          %242 = vsyncadd [#allocation5], %s241
          %s243 = sshll.u32 [#allocation4], 4
          %s244 = int_to_ptr.vmem [resolvable:$true] %s243
          %249 = dma.hbm_to_vmem [thread:$0]  %s6, 9216, %s244, [#allocation5], 64, 64, 4
        $region32: #{tpu_custom_call.1} parent=11 // pred_fallthru
          _
        // Predicated region
        $region33: #{tpu_custom_call.1} parent=11 // pred_check
          %p250 = pneg %p182
        $region34: #{tpu_custom_call.1} parent=11 // pred_check_branch
          %252 = sbr.rel (%p250) target = $region36
        $region35: #{tpu_custom_call.1} parent=11 // pred_region
          _
        $region36: #{tpu_custom_call.1} parent=11 // pred_fallthru
          _
      $region12: #{tpu_custom_call.1} parent=5 // pred_fallthru
        _
      %p253 = scmp.lt.s32.totalorder %s18, 4
      // Predicated region
      $region37: #{tpu_custom_call.1} parent=5 // pred_check
        %p254 = pneg %p253
      $region38: #{tpu_custom_call.1} parent=5 // pred_check_branch
        %256 = sbr.rel (%p254) target = $region40
      $region39: #{tpu_custom_call.1} parent=5 // pred_region
        // Predicated region
        $region41: #{tpu_custom_call.1} parent=39 // pred_check
          %p257 = pneg %p50
        $region42: #{tpu_custom_call.1} parent=39 // pred_check_branch
          %259 = sbr.rel (%p257) target = $region44
        $region43: #{tpu_custom_call.1} parent=39 // pred_region
          %p260 = scmp.lt.s32.totalorder %s26, 1
          %s261 = scalar_select %p260, %s26, 1
          %s262 = smul.addr %s261, 20
          %s263 = smul.addr %s262, 8
          %s264 = scalar_lea.vmem %s1, %s263
        $region44: #{tpu_custom_call.1} parent=39 // pred_fallthru
          _
      $region40: #{tpu_custom_call.1} parent=5 // pred_fallthru
        _
      %p265 = scmp.le.s32.totalorder 1, %s18
      %p266 = scmp.lt.s32.totalorder %s18, 5
      %p267 = pnand %p265, %p266
      %p268 = pneg %p267
      // Predicated region
      $region45: #{tpu_custom_call.1} parent=5 // pred_check
        _
      $region46: #{tpu_custom_call.1} parent=5 // pred_check_branch
        %270 = sbr.rel (%p267) target = $region48
      $region47: #{tpu_custom_call.1} parent=5 // pred_region
        %s271 = ssub.s32 %s18, 1
        // Predicated region
        $region49: #{tpu_custom_call.1} parent=47 // pred_check
          %p272 = pneg %p161
        $region50: #{tpu_custom_call.1} parent=47 // pred_check_branch
          %274 = sbr.rel (%p272) target = $region52
        $region51: #{tpu_custom_call.1} parent=47 // pred_region
          %275 = dma.done [#allocation5], 9216
        $region52: #{tpu_custom_call.1} parent=47 // pred_fallthru
          _
        %p276 = scmp.lt.s32.totalorder %s28, 1
        %s277 = scalar_select %p276, %s28, 1
        %s278 = smul.addr %s277, 20
        %s279 = smul.addr %s278, 8
        %s280 = scalar_lea.vmem %s1, %s279
        %p281 = pneg %p56
        %p282 = pneg %p53
        %p283 = pneg %p77
        %p284 = pneg %p74
        %p285 = pneg %p98
        %p286 = pneg %p95
        %p287 = pneg %p119
        %p288 = pneg %p116
        %p289 = pneg %p140
        %p290 = pneg %p137
        %p291 = pneg %p161
        %p292 = pneg %p158
        %p293 = pneg %p182
        %p294 = pneg %p179
        %p295 = pneg %p210
        %p296 = pneg %p207
        %s297 = sand.u32 %s197, 1
        %s298 = scalar_lea.sflag [#allocation6], %s297
        %s299 = sand.u32 %s197, 1
        %s300 = smul.addr %s299, 128
        %s301 = scalar_lea.vmem [#allocation7], %s300
        %p302 = scmp.lt.s32.totalorder %s28, 1
        %s303 = scalar_select %p302, %s28, 1
        %s304 = smul.addr %s303, 20
        %s305 = smul.addr %s304, 8
        %s306 = scalar_lea.vmem %s1, %s305
        %s308 = sand.u32 %s28, 1
        %p309 = scmp.eq.s32.totalorder %s28, 0
        // Predicated region
        $region53: #{tpu_custom_call.1} parent=47 // pred_check
          %p310 = pneg %p309
        $region54: #{tpu_custom_call.1} parent=47 // pred_check_branch
          %312 = sbr.rel (%p310) target = $region56
        $region55: #{tpu_custom_call.1} parent=47 // pred_region
          %s313 = smul.u32 %s27, 288
          %s314 = scalar_lea.vmem %s0, %s313
          %p316 = scmp.lt.u32.totalorder 160, 8
          %p317 = pneg %p316
          // Predicated region
          $region57: #{tpu_custom_call.1} parent=55 // pred_check
            _
          $region58: #{tpu_custom_call.1} parent=55 // pred_check_branch
            %319 = sbr.rel (%p316) target = $region60
          $region59: #{tpu_custom_call.1} parent=55 // pred_region
            %s335 = sand.u32 160, 7
            %p336 = scmp.eq.s32.totalorder %s335, 0
            // Predicated region
            $region72: #{tpu_custom_call.1} parent=59 // pred_check
              %p337 = pneg %p336
            $region73: #{tpu_custom_call.1} parent=59 // pred_check_branch
              %339 = sbr.rel (%p337) target = $region75
            $region74: #{tpu_custom_call.1} parent=59 // pred_region
              loop: start=0, step=1, limit=1
              $region76: #{tpu_custom_call.1} parent=74 // loop_pre_header
                _
              $region77: #{tpu_custom_call.1} parent=74 // loop_header
                %s341 = sphi 0, %s345
                %p342 = scmp.ge.s32.totalorder %s341, 1
                %s346 = sphi %s314, %s314
                %s347 = sphi [#allocation2], [#allocation2]
              $region78: #{tpu_custom_call.1} parent=74 // loop_header_branch
                %344 = sbr.rel (%p342) target = $region82
              $region79: #{tpu_custom_call.1} parent=74 // loop_body
                %v348 = vld [vmem:[%s346] sm:$0xff]
                %349 = vst [vmem:[%s347] sm:$0xff] %v348
                %v350 = vld [vmem:[%s346 + $0x8] sm:$0xff]
                %351 = vst [vmem:[%s347 + $0x8] sm:$0xff] %v350
                %v352 = vld [vmem:[%s346 + $0x10] sm:$0xff]
                %353 = vst [vmem:[%s347 + $0x10] sm:$0xff] %v352
                %v354 = vld [vmem:[%s346 + $0x18] sm:$0xff]
                %355 = vst [vmem:[%s347 + $0x18] sm:$0xff] %v354
                %v356 = vld [vmem:[%s346 + $0x20] sm:$0xff]
                %357 = vst [vmem:[%s347 + $0x20] sm:$0xff] %v356
                %v358 = vld [vmem:[%s346 + $0x28] sm:$0xff]
                %359 = vst [vmem:[%s347 + $0x28] sm:$0xff] %v358
                %v360 = vld [vmem:[%s346 + $0x30] sm:$0xff]
                %361 = vst [vmem:[%s347 + $0x30] sm:$0xff] %v360
                %v362 = vld [vmem:[%s346 + $0x38] sm:$0xff]
                %363 = vst [vmem:[%s347 + $0x38] sm:$0xff] %v362
                %v364 = vld [vmem:[%s346 + $0x40] sm:$0xff]
                %365 = vst [vmem:[%s347 + $0x40] sm:$0xff] %v364
                %v366 = vld [vmem:[%s346 + $0x48] sm:$0xff]
                %367 = vst [vmem:[%s347 + $0x48] sm:$0xff] %v366
                %v368 = vld [vmem:[%s346 + $0x50] sm:$0xff]
                %369 = vst [vmem:[%s347 + $0x50] sm:$0xff] %v368
                %v370 = vld [vmem:[%s346 + $0x58] sm:$0xff]
                %371 = vst [vmem:[%s347 + $0x58] sm:$0xff] %v370
                %v372 = vld [vmem:[%s346 + $0x60] sm:$0xff]
                %373 = vst [vmem:[%s347 + $0x60] sm:$0xff] %v372
                %v374 = vld [vmem:[%s346 + $0x68] sm:$0xff]
                %375 = vst [vmem:[%s347 + $0x68] sm:$0xff] %v374
                %v376 = vld [vmem:[%s346 + $0x70] sm:$0xff]
                %377 = vst [vmem:[%s347 + $0x70] sm:$0xff] %v376
                %v378 = vld [vmem:[%s346 + $0x78] sm:$0xff]
                %379 = vst [vmem:[%s347 + $0x78] sm:$0xff] %v378
                %v380 = vld [vmem:[%s346 + $0x80] sm:$0xff]
                %381 = vst [vmem:[%s347 + $0x80] sm:$0xff] %v380
                %v382 = vld [vmem:[%s346 + $0x88] sm:$0xff]
                %383 = vst [vmem:[%s347 + $0x88] sm:$0xff] %v382
                %v384 = vld [vmem:[%s346 + $0x90] sm:$0xff]
                %385 = vst [vmem:[%s347 + $0x90] sm:$0xff] %v384
                %v386 = vld [vmem:[%s346 + $0x98] sm:$0xff]
                %387 = vst [vmem:[%s347 + $0x98] sm:$0xff] %v386
              $region80: #{tpu_custom_call.1} parent=74 // loop_footer
                %s345 = sadd.s32 1, %s341
              $region81: #{tpu_custom_call.1} parent=74 // loop_footer_branch
                %340 = sbr.rel target = $region77
              $region82: #{tpu_custom_call.1} parent=74 // loop_exit
                _
            $region75: #{tpu_custom_call.1} parent=59 // pred_fallthru
              _
            %p388 = pneg %p336
            // Predicated region
            $region83: #{tpu_custom_call.1} parent=59 // pred_check
              _
            $region84: #{tpu_custom_call.1} parent=59 // pred_check_branch
              %390 = sbr.rel (%p336) target = $region86
            $region85: #{tpu_custom_call.1} parent=59 // pred_region
              %s391 = sand.u32 160, 7
            $region86: #{tpu_custom_call.1} parent=59 // pred_fallthru
              _
          $region60: #{tpu_custom_call.1} parent=55 // pred_fallthru
            _
          // Predicated region
          $region61: #{tpu_custom_call.1} parent=55 // pred_check
            %p320 = pneg %p316
          $region62: #{tpu_custom_call.1} parent=55 // pred_check_branch
            %322 = sbr.rel (%p320) target = $region64
          $region63: #{tpu_custom_call.1} parent=55 // pred_region
            %s323 = sshll.u32 1, 160
            %s324 = ssub.s32 %s323, 1
            loop: start=0, step=1, limit=1
            $region65: #{tpu_custom_call.1} parent=63 // loop_pre_header
              _
            $region66: #{tpu_custom_call.1} parent=63 // loop_header
              %s326 = sphi 0, %s330
              %p327 = scmp.ge.s32.totalorder %s326, 1
              %s331 = sphi %s314, %s314
              %s332 = sphi [#allocation2], [#allocation2]
            $region67: #{tpu_custom_call.1} parent=63 // loop_header_branch
              %329 = sbr.rel (%p327) target = $region71
            $region68: #{tpu_custom_call.1} parent=63 // loop_body
              %v333 = vld [vmem:[%s331] sm:%s324]
              %334 = vst [vmem:[%s332] sm:%s324] %v333
            $region69: #{tpu_custom_call.1} parent=63 // loop_footer
              %s330 = sadd.s32 1, %s326
            $region70: #{tpu_custom_call.1} parent=63 // loop_footer_branch
              %325 = sbr.rel target = $region66
            $region71: #{tpu_custom_call.1} parent=63 // loop_exit
              _
          $region64: #{tpu_custom_call.1} parent=55 // pred_fallthru
            _
          // Predicated region
          $region87: #{tpu_custom_call.1} parent=55 // pred_check
            _
          $region88: #{tpu_custom_call.1} parent=55 // pred_check_branch
            %394 = sbr.rel (0) target = $region90
          $region89: #{tpu_custom_call.1} parent=55 // pred_region
            %395 = vsyncadd [#allocation3], 2560
          $region90: #{tpu_custom_call.1} parent=55 // pred_fallthru
            _
        $region56: #{tpu_custom_call.1} parent=47 // pred_fallthru
          _
        %s396 = smul.u32 %s27, 288
        %s397 = smul.u32 %s28, 128
        %s398 = sadd.s32 %s396, %s397
        %s399 = smul.u32 %s308, 160
        %s400 = scalar_lea.vmem [#allocation2], %s399
        %s401 = scalar_lea.sflag [#allocation3], %s308
        %s402 = smul.u32 160, 1
        %s403 = sshll.u32 %s402, 4
        %404 = dma.done %s401, %s403
        %s405 = sadd.s32 %s28, 1
        %p406 = scmp.lt.s32.totalorder %s405, 2
        // Predicated region
        $region91: #{tpu_custom_call.1} parent=47 // pred_check
          %p407 = pneg %p406
        $region92: #{tpu_custom_call.1} parent=47 // pred_check_branch
          %409 = sbr.rel (%p407) target = $region94
        $region93: #{tpu_custom_call.1} parent=47 // pred_region
          %s410 = ssub.s32 1, %s308
          %s411 = smul.u32 %s405, 128
          %s412 = sadd.s32 %s396, %s411
          %s413 = scalar_lea.vmem %s0, %s412
          %s414 = smul.u32 %s410, 160
          %s415 = scalar_lea.vmem [#allocation2], %s414
          %s416 = scalar_lea.sflag [#allocation3], %s410
          %p418 = scmp.lt.u32.totalorder 160, 8
          %p419 = pneg %p418
          // Predicated region
          $region95: #{tpu_custom_call.1} parent=93 // pred_check
            _
          $region96: #{tpu_custom_call.1} parent=93 // pred_check_branch
            %421 = sbr.rel (%p418) target = $region98
          $region97: #{tpu_custom_call.1} parent=93 // pred_region
            %s437 = sand.u32 160, 7
            %p438 = scmp.eq.s32.totalorder %s437, 0
            // Predicated region
            $region110: #{tpu_custom_call.1} parent=97 // pred_check
              %p439 = pneg %p438
            $region111: #{tpu_custom_call.1} parent=97 // pred_check_branch
              %441 = sbr.rel (%p439) target = $region113
            $region112: #{tpu_custom_call.1} parent=97 // pred_region
              loop: start=0, step=1, limit=1
              $region114: #{tpu_custom_call.1} parent=112 // loop_pre_header
                _
              $region115: #{tpu_custom_call.1} parent=112 // loop_header
                %s443 = sphi 0, %s447
                %p444 = scmp.ge.s32.totalorder %s443, 1
                %s448 = sphi %s413, %s413
                %s449 = sphi %s415, %s415
              $region116: #{tpu_custom_call.1} parent=112 // loop_header_branch
                %446 = sbr.rel (%p444) target = $region120
              $region117: #{tpu_custom_call.1} parent=112 // loop_body
                %v450 = vld [vmem:[%s448] sm:$0xff]
                %451 = vst [vmem:[%s449] sm:$0xff] %v450
                %v452 = vld [vmem:[%s448 + $0x8] sm:$0xff]
                %453 = vst [vmem:[%s449 + $0x8] sm:$0xff] %v452
                %v454 = vld [vmem:[%s448 + $0x10] sm:$0xff]
                %455 = vst [vmem:[%s449 + $0x10] sm:$0xff] %v454
                %v456 = vld [vmem:[%s448 + $0x18] sm:$0xff]
                %457 = vst [vmem:[%s449 + $0x18] sm:$0xff] %v456
                %v458 = vld [vmem:[%s448 + $0x20] sm:$0xff]
                %459 = vst [vmem:[%s449 + $0x20] sm:$0xff] %v458
                %v460 = vld [vmem:[%s448 + $0x28] sm:$0xff]
                %461 = vst [vmem:[%s449 + $0x28] sm:$0xff] %v460
                %v462 = vld [vmem:[%s448 + $0x30] sm:$0xff]
                %463 = vst [vmem:[%s449 + $0x30] sm:$0xff] %v462
                %v464 = vld [vmem:[%s448 + $0x38] sm:$0xff]
                %465 = vst [vmem:[%s449 + $0x38] sm:$0xff] %v464
                %v466 = vld [vmem:[%s448 + $0x40] sm:$0xff]
                %467 = vst [vmem:[%s449 + $0x40] sm:$0xff] %v466
                %v468 = vld [vmem:[%s448 + $0x48] sm:$0xff]
                %469 = vst [vmem:[%s449 + $0x48] sm:$0xff] %v468
                %v470 = vld [vmem:[%s448 + $0x50] sm:$0xff]
                %471 = vst [vmem:[%s449 + $0x50] sm:$0xff] %v470
                %v472 = vld [vmem:[%s448 + $0x58] sm:$0xff]
                %473 = vst [vmem:[%s449 + $0x58] sm:$0xff] %v472
                %v474 = vld [vmem:[%s448 + $0x60] sm:$0xff]
                %475 = vst [vmem:[%s449 + $0x60] sm:$0xff] %v474
                %v476 = vld [vmem:[%s448 + $0x68] sm:$0xff]
                %477 = vst [vmem:[%s449 + $0x68] sm:$0xff] %v476
                %v478 = vld [vmem:[%s448 + $0x70] sm:$0xff]
                %479 = vst [vmem:[%s449 + $0x70] sm:$0xff] %v478
                %v480 = vld [vmem:[%s448 + $0x78] sm:$0xff]
                %481 = vst [vmem:[%s449 + $0x78] sm:$0xff] %v480
                %v482 = vld [vmem:[%s448 + $0x80] sm:$0xff]
                %483 = vst [vmem:[%s449 + $0x80] sm:$0xff] %v482
                %v484 = vld [vmem:[%s448 + $0x88] sm:$0xff]
                %485 = vst [vmem:[%s449 + $0x88] sm:$0xff] %v484
                %v486 = vld [vmem:[%s448 + $0x90] sm:$0xff]
                %487 = vst [vmem:[%s449 + $0x90] sm:$0xff] %v486
                %v488 = vld [vmem:[%s448 + $0x98] sm:$0xff]
                %489 = vst [vmem:[%s449 + $0x98] sm:$0xff] %v488
              $region118: #{tpu_custom_call.1} parent=112 // loop_footer
                %s447 = sadd.s32 1, %s443
              $region119: #{tpu_custom_call.1} parent=112 // loop_footer_branch
                %442 = sbr.rel target = $region115
              $region120: #{tpu_custom_call.1} parent=112 // loop_exit
                _
            $region113: #{tpu_custom_call.1} parent=97 // pred_fallthru
              _
            %p490 = pneg %p438
            // Predicated region
            $region121: #{tpu_custom_call.1} parent=97 // pred_check
              _
            $region122: #{tpu_custom_call.1} parent=97 // pred_check_branch
              %492 = sbr.rel (%p438) target = $region124
            $region123: #{tpu_custom_call.1} parent=97 // pred_region
              %s493 = sand.u32 160, 7
            $region124: #{tpu_custom_call.1} parent=97 // pred_fallthru
              _
          $region98: #{tpu_custom_call.1} parent=93 // pred_fallthru
            _
          // Predicated region
          $region99: #{tpu_custom_call.1} parent=93 // pred_check
            %p422 = pneg %p418
          $region100: #{tpu_custom_call.1} parent=93 // pred_check_branch
            %424 = sbr.rel (%p422) target = $region102
          $region101: #{tpu_custom_call.1} parent=93 // pred_region
            %s425 = sshll.u32 1, 160
            %s426 = ssub.s32 %s425, 1
            loop: start=0, step=1, limit=1
            $region103: #{tpu_custom_call.1} parent=101 // loop_pre_header
              _
            $region104: #{tpu_custom_call.1} parent=101 // loop_header
              %s428 = sphi 0, %s432
              %p429 = scmp.ge.s32.totalorder %s428, 1
              %s433 = sphi %s413, %s413
              %s434 = sphi %s415, %s415
            $region105: #{tpu_custom_call.1} parent=101 // loop_header_branch
              %431 = sbr.rel (%p429) target = $region109
            $region106: #{tpu_custom_call.1} parent=101 // loop_body
              %v435 = vld [vmem:[%s433] sm:%s426]
              %436 = vst [vmem:[%s434] sm:%s426] %v435
            $region107: #{tpu_custom_call.1} parent=101 // loop_footer
              %s432 = sadd.s32 1, %s428
            $region108: #{tpu_custom_call.1} parent=101 // loop_footer_branch
              %427 = sbr.rel target = $region104
            $region109: #{tpu_custom_call.1} parent=101 // loop_exit
              _
          $region102: #{tpu_custom_call.1} parent=93 // pred_fallthru
            _
          // Predicated region
          $region125: #{tpu_custom_call.1} parent=93 // pred_check
            _
          $region126: #{tpu_custom_call.1} parent=93 // pred_check_branch
            %496 = sbr.rel (0) target = $region128
          $region127: #{tpu_custom_call.1} parent=93 // pred_region
            %497 = vsyncadd %s416, 2560
          $region128: #{tpu_custom_call.1} parent=93 // pred_fallthru
            _
        $region94: #{tpu_custom_call.1} parent=47 // pred_fallthru
          _
        %v498 = vld [vmem:[%s400] sm:$0xff]
        %v499 = vld [vmem:[%s400 + $0x8] sm:$0xff]
        %v500 = vld [vmem:[%s400 + $0x10] sm:$0xff]
        %v501 = vld [vmem:[%s400 + $0x18] sm:$0xff]
        %v502 = vld [vmem:[%s400 + $0x20] sm:$0xff]
        %v503 = vld [vmem:[%s400 + $0x28] sm:$0xff]
        %v504 = vld [vmem:[%s400 + $0x30] sm:$0xff]
        %v505 = vld [vmem:[%s400 + $0x38] sm:$0xff]
        %v506 = vld [vmem:[%s400 + $0x40] sm:$0xff]
        %v507 = vld [vmem:[%s400 + $0x48] sm:$0xff]
        %v508 = vld [vmem:[%s400 + $0x50] sm:$0xff]
        %v509 = vld [vmem:[%s400 + $0x58] sm:$0xff]
        %v510 = vld [vmem:[%s400 + $0x60] sm:$0xff]
        %v511 = vld [vmem:[%s400 + $0x68] sm:$0xff]
        %v512 = vld [vmem:[%s400 + $0x70] sm:$0xff]
        %v513 = vld [vmem:[%s400 + $0x78] sm:$0xff]
        %v514 = vld [vmem:[%s400 + $0x80] sm:$0xff]
        %v515 = vld [vmem:[%s400 + $0x88] sm:$0xff]
        %v516 = vld [vmem:[%s400 + $0x90] sm:$0xff]
        %v517 = vld [vmem:[%s400 + $0x98] sm:$0xff]
        %v518 = vpack.c.bf16 %v499, %v498
        %v519 = vpack.c.bf16 %v501, %v500
        %v520 = vpack.c.bf16 %v503, %v502
        %v521 = vpack.c.bf16 %v505, %v504
        %v522 = vpack.c.bf16 %v507, %v506
        %v523 = vpack.c.bf16 %v509, %v508
        %v524 = vpack.c.bf16 %v511, %v510
        %v525 = vpack.c.bf16 %v513, %v512
        %v526 = vpack.c.bf16 %v515, %v514
        %v527 = vpack.c.bf16 %v517, %v516
        %v528 = vld [vmem:[%s4] sm:$0xf]
        %v529 = vld [vmem:[%s4 + $0x4] sm:$0xf]
        %v530 = vld [vmem:[%s4 + $0x8] sm:$0xf]
        %v531 = vld [vmem:[%s4 + $0xc] sm:$0xf]
        %v532 = vld [vmem:[%s4 + $0x10] sm:$0xf]
        %v533 = vld [vmem:[%s4 + $0x14] sm:$0xf]
        %v534 = vld [vmem:[%s4 + $0x18] sm:$0xf]
        %v535 = vld [vmem:[%s4 + $0x1c] sm:$0xf]
        %v536 = vld [vmem:[%s4 + $0x20] sm:$0xf]
        %v537 = vld [vmem:[%s4 + $0x24] sm:$0xf]
        %v538 = vld [vmem:[%s4 + $0x28] sm:$0xf]
        %v539 = vld [vmem:[%s4 + $0x2c] sm:$0xf]
        %v540 = vld [vmem:[%s4 + $0x30] sm:$0xf]
        %v541 = vld [vmem:[%s4 + $0x34] sm:$0xf]
        %v542 = vld [vmem:[%s4 + $0x38] sm:$0xf]
        %v543 = vld [vmem:[%s4 + $0x3c] sm:$0xf]
        %v544 = vld [vmem:[%s5] sm:$0x1]
        %v546 = vlaneseq
        %v547 = vshrl.u32 %v546, 7
        %v548 = vsub.s32 0, %v547
        %v549 = vrot.slane %v544, %v548
        %v567 = vunpack.c.l.b16 %v528
        %v568 = vunpack.c.l.b16 %v529
        %v569 = vunpack.c.l.b16 %v530
        %v570 = vunpack.c.l.b16 %v531
        %v571 = vunpack.c.l.b16 %v532
        %v572 = vunpack.c.l.b16 %v533
        %v573 = vunpack.c.l.b16 %v534
        %v574 = vunpack.c.l.b16 %v535
        %v575 = vunpack.c.l.b16 %v536
        %v576 = vunpack.c.l.b16 %v537
        %v577 = vunpack.c.l.b16 %v538
        %v578 = vunpack.c.l.b16 %v539
        %v579 = vunpack.c.l.b16 %v540
        %v580 = vunpack.c.l.b16 %v541
        %v581 = vunpack.c.l.b16 %v542
        %v582 = vunpack.c.l.b16 %v543
        %v583 = vpack.c.b16 %v568, %v567
        %v584 = vpack.c.b16 %v570, %v569
        %v585 = vpack.c.b16 %v572, %v571
        %v586 = vpack.c.b16 %v574, %v573
        %v587 = vpack.c.b16 %v576, %v575
        %v588 = vpack.c.b16 %v578, %v577
        %v589 = vpack.c.b16 %v580, %v579
        %v590 = vpack.c.b16 %v582, %v581
        %599 = vmatprep.subr.bf16.mxu0 0
        %600 = vmatpush1.bf16.msra.mxu0 %v590
        %601 = vmatprep.subr.bf16.mxu0 0
        %602 = vmatpush1.bf16.msra.mxu0 %v589
        %603 = vmatprep.subr.bf16.mxu0 0
        %604 = vmatpush1.bf16.msra.mxu0 %v588
        %605 = vmatprep.subr.bf16.mxu0 0
        %606 = vmatpush1.bf16.msra.mxu0 %v587
        %607 = vmatprep.subr.bf16.mxu0 0
        %608 = vmatpush1.bf16.msra.mxu0 %v586
        %609 = vmatprep.subr.bf16.mxu0 0
        %610 = vmatpush1.bf16.msra.mxu0 %v585
        %611 = vmatprep.subr.bf16.mxu0 0
        %612 = vmatpush1.bf16.msra.mxu0 %v584
        %613 = vmatprep.subr.bf16.mxu0 0
        %614 = vmatpush1.bf16.msra.mxu0 %v583
        %615 = vmatprep.subr.bf16.mxu0 0
        %616 = vmatpush2.bf16.msra.mxu0 0
        %617 = vmatprep.subr.bf16.mxu0 0
        %618 = vmatpush2.bf16.msra.mxu0 0
        %619 = vmatprep.subr.bf16.mxu0 0
        %620 = vmatpush2.bf16.msra.mxu0 0
        %621 = vmatprep.subr.bf16.mxu0 0
        %622 = vmatpush2.bf16.msra.mxu0 0
        %623 = vmatprep.subr.bf16.mxu0 0
        %624 = vmatpush2.bf16.msra.mxu0 0
        %625 = vmatprep.subr.bf16.mxu0 0
        %626 = vmatpush2.bf16.msra.mxu0 0
        %627 = vmatprep.subr.bf16.mxu0 0
        %628 = vmatpush2.bf16.msra.mxu0 0
        %629 = vmatprep.subr.bf16.mxu0 0
        %630 = vmatpush2.bf16.msra.mxu0 0
        %631 = vmatprep.mubr.bf16.mxu0 0
        %632 = vmatmul.mubr.bf16.gmra.mxu0 %v518
        %v633 = vpop.f32.mrf.mxu0
        %v634 = vadd.f32 %v549, %v633
        %v635 = vpop.f32.mrf.mxu0
        %v636 = vpop.f32.mrf.mxu0
        %v637 = vadd.f32 %v549, %v636
        %v638 = vpop.f32.mrf.mxu0
        %639 = vmatprep.mubr.bf16.mxu0 0
        %640 = vmatmul.mubr.bf16.gmra.mxu0 %v519
        %v641 = vpop.f32.mrf.mxu0
        %v642 = vadd.f32 %v549, %v641
        %v643 = vpop.f32.mrf.mxu0
        %v644 = vpop.f32.mrf.mxu0
        %v645 = vadd.f32 %v549, %v644
        %v646 = vpop.f32.mrf.mxu0
        %647 = vmatprep.mubr.bf16.mxu0 0
        %648 = vmatmul.mubr.bf16.gmra.mxu0 %v520
        %v649 = vpop.f32.mrf.mxu0
        %v650 = vadd.f32 %v549, %v649
        %v651 = vpop.f32.mrf.mxu0
        %v652 = vpop.f32.mrf.mxu0
        %v653 = vadd.f32 %v549, %v652
        %v654 = vpop.f32.mrf.mxu0
        %655 = vmatprep.mubr.bf16.mxu0 0
        %656 = vmatmul.mubr.bf16.gmra.mxu0 %v521
        %v657 = vpop.f32.mrf.mxu0
        %v658 = vadd.f32 %v549, %v657
        %v659 = vpop.f32.mrf.mxu0
        %v660 = vpop.f32.mrf.mxu0
        %v661 = vadd.f32 %v549, %v660
        %v662 = vpop.f32.mrf.mxu0
        %663 = vmatprep.mubr.bf16.mxu0 0
        %664 = vmatmul.mubr.bf16.gmra.mxu0 %v522
        %v665 = vpop.f32.mrf.mxu0
        %v666 = vadd.f32 %v549, %v665
        %v667 = vpop.f32.mrf.mxu0
        %v668 = vpop.f32.mrf.mxu0
        %v669 = vadd.f32 %v549, %v668
        %v670 = vpop.f32.mrf.mxu0
        %671 = vmatprep.mubr.bf16.mxu0 0
        %672 = vmatmul.mubr.bf16.gmra.mxu0 %v523
        %v673 = vpop.f32.mrf.mxu0
        %v674 = vadd.f32 %v549, %v673
        %v675 = vpop.f32.mrf.mxu0
        %v676 = vpop.f32.mrf.mxu0
        %v677 = vadd.f32 %v549, %v676
        %v678 = vpop.f32.mrf.mxu0
        %679 = vmatprep.mubr.bf16.mxu0 0
        %680 = vmatmul.mubr.bf16.gmra.mxu0 %v524
        %v681 = vpop.f32.mrf.mxu0
        %v682 = vadd.f32 %v549, %v681
        %v683 = vpop.f32.mrf.mxu0
        %v684 = vpop.f32.mrf.mxu0
        %v685 = vadd.f32 %v549, %v684
        %v686 = vpop.f32.mrf.mxu0
        %687 = vmatprep.mubr.bf16.mxu0 0
        %688 = vmatmul.mubr.bf16.gmra.mxu0 %v525
        %v689 = vpop.f32.mrf.mxu0
        %v690 = vadd.f32 %v549, %v689
        %v691 = vpop.f32.mrf.mxu0
        %v692 = vpop.f32.mrf.mxu0
        %v693 = vadd.f32 %v549, %v692
        %v694 = vpop.f32.mrf.mxu0
        %695 = vmatprep.mubr.bf16.mxu0 0
        %696 = vmatmul.mubr.bf16.gmra.mxu0 %v526
        %v697 = vpop.f32.mrf.mxu0
        %v698 = vadd.f32 %v549, %v697
        %v699 = vpop.f32.mrf.mxu0
        %v700 = vpop.f32.mrf.mxu0
        %v701 = vadd.f32 %v549, %v700
        %v702 = vpop.f32.mrf.mxu0
        %703 = vmatprep.mubr.bf16.mxu0 0
        %704 = vmatmul.mubr.bf16.gmra.mxu0 %v527
        %v705 = vpop.f32.mrf.mxu0
        %v706 = vadd.f32 %v549, %v705
        %v707 = vpop.f32.mrf.mxu0
        %v708 = vpop.f32.mrf.mxu0
        %v709 = vadd.f32 %v549, %v708
        %v710 = vpop.f32.mrf.mxu0
        %711 = vdwg.mxu0
        %v712 = vmax.f32 %v634, 0.0
        %v713 = vmax.f32 %v637, 0.0
        %v714 = vmax.f32 %v642, 0.0
        %v715 = vmax.f32 %v645, 0.0
        %v716 = vmax.f32 %v650, 0.0
        %v717 = vmax.f32 %v653, 0.0
        %v718 = vmax.f32 %v658, 0.0
        %v719 = vmax.f32 %v661, 0.0
        %v720 = vmax.f32 %v666, 0.0
        %v721 = vmax.f32 %v669, 0.0
        %v722 = vmax.f32 %v674, 0.0
        %v723 = vmax.f32 %v677, 0.0
        %v724 = vmax.f32 %v682, 0.0
        %v725 = vmax.f32 %v685, 0.0
        %v726 = vmax.f32 %v690, 0.0
        %v727 = vmax.f32 %v693, 0.0
        %v728 = vmax.f32 %v698, 0.0
        %v729 = vmax.f32 %v701, 0.0
        %v730 = vmax.f32 %v706, 0.0
        %v731 = vmax.f32 %v709, 0.0
        %v732 = vld [vmem:[%s306] sm:$0xff]
        %v733 = vld [vmem:[%s306 + $0x8] sm:$0xff]
        %v734 = vld [vmem:[%s306 + $0x10] sm:$0xff]
        %v735 = vld [vmem:[%s306 + $0x18] sm:$0xff]
        %v736 = vld [vmem:[%s306 + $0x20] sm:$0xff]
        %v737 = vld [vmem:[%s306 + $0x28] sm:$0xff]
        %v738 = vld [vmem:[%s306 + $0x30] sm:$0xff]
        %v739 = vld [vmem:[%s306 + $0x38] sm:$0xff]
        %v740 = vld [vmem:[%s306 + $0x40] sm:$0xff]
        %v741 = vld [vmem:[%s306 + $0x48] sm:$0xff]
        %v742 = vld [vmem:[%s306 + $0x50] sm:$0xff]
        %v743 = vld [vmem:[%s306 + $0x58] sm:$0xff]
        %v744 = vld [vmem:[%s306 + $0x60] sm:$0xff]
        %v745 = vld [vmem:[%s306 + $0x68] sm:$0xff]
        %v746 = vld [vmem:[%s306 + $0x70] sm:$0xff]
        %v747 = vld [vmem:[%s306 + $0x78] sm:$0xff]
        %v748 = vld [vmem:[%s306 + $0x80] sm:$0xff]
        %v749 = vld [vmem:[%s306 + $0x88] sm:$0xff]
        %v750 = vld [vmem:[%s306 + $0x90] sm:$0xff]
        %v751 = vld [vmem:[%s306 + $0x98] sm:$0xff]
        %753 = vset.pattern.permute.xlu0 0
        %754 = vperm.xlu0 %753, %v732
        %v755 = vpop.permute.xlu0 %754
        %758 = vset.pattern.permute.xlu0 0
        %759 = vperm.xlu0 %758, %v733
        %v760 = vpop.permute.xlu0 %759
        %763 = vset.pattern.permute.xlu0 0
        %764 = vperm.xlu0 %763, %v734
        %v765 = vpop.permute.xlu0 %764
        %768 = vset.pattern.permute.xlu0 0
        %769 = vperm.xlu0 %768, %v735
        %v770 = vpop.permute.xlu0 %769
        %773 = vset.pattern.permute.xlu0 0
        %774 = vperm.xlu0 %773, %v736
        %v775 = vpop.permute.xlu0 %774
        %778 = vset.pattern.permute.xlu0 0
        %779 = vperm.xlu0 %778, %v737
        %v780 = vpop.permute.xlu0 %779
        %783 = vset.pattern.permute.xlu0 0
        %784 = vperm.xlu0 %783, %v738
        %v785 = vpop.permute.xlu0 %784
        %788 = vset.pattern.permute.xlu0 0
        %789 = vperm.xlu0 %788, %v739
        %v790 = vpop.permute.xlu0 %789
        %793 = vset.pattern.permute.xlu0 0
        %794 = vperm.xlu0 %793, %v740
        %v795 = vpop.permute.xlu0 %794
        %798 = vset.pattern.permute.xlu0 0
        %799 = vperm.xlu0 %798, %v741
        %v800 = vpop.permute.xlu0 %799
        %803 = vset.pattern.permute.xlu0 0
        %804 = vperm.xlu0 %803, %v742
        %v805 = vpop.permute.xlu0 %804
        %808 = vset.pattern.permute.xlu0 0
        %809 = vperm.xlu0 %808, %v743
        %v810 = vpop.permute.xlu0 %809
        %813 = vset.pattern.permute.xlu0 0
        %814 = vperm.xlu0 %813, %v744
        %v815 = vpop.permute.xlu0 %814
        %818 = vset.pattern.permute.xlu0 0
        %819 = vperm.xlu0 %818, %v745
        %v820 = vpop.permute.xlu0 %819
        %823 = vset.pattern.permute.xlu0 0
        %824 = vperm.xlu0 %823, %v746
        %v825 = vpop.permute.xlu0 %824
        %828 = vset.pattern.permute.xlu0 0
        %829 = vperm.xlu0 %828, %v747
        %v830 = vpop.permute.xlu0 %829
        %833 = vset.pattern.permute.xlu0 0
        %834 = vperm.xlu0 %833, %v748
        %v835 = vpop.permute.xlu0 %834
        %838 = vset.pattern.permute.xlu0 0
        %839 = vperm.xlu0 %838, %v749
        %v840 = vpop.permute.xlu0 %839
        %843 = vset.pattern.permute.xlu0 0
        %844 = vperm.xlu0 %843, %v750
        %v845 = vpop.permute.xlu0 %844
        %848 = vset.pattern.permute.xlu0 0
        %849 = vperm.xlu0 %848, %v751
        %v850 = vpop.permute.xlu0 %849
        %v852 = vmul.f32 %v712, %v755
        %v853 = vmul.f32 %v713, %v760
        %v854 = vmul.f32 %v714, %v765
        %v855 = vmul.f32 %v715, %v770
        %v856 = vmul.f32 %v716, %v775
        %v857 = vmul.f32 %v717, %v780
        %v858 = vmul.f32 %v718, %v785
        %v859 = vmul.f32 %v719, %v790
        %v860 = vmul.f32 %v720, %v795
        %v861 = vmul.f32 %v721, %v800
        %v862 = vmul.f32 %v722, %v805
        %v863 = vmul.f32 %v723, %v810
        %v864 = vmul.f32 %v724, %v815
        %v865 = vmul.f32 %v725, %v820
        %v866 = vmul.f32 %v726, %v825
        %v867 = vmul.f32 %v727, %v830
        %v868 = vmul.f32 %v728, %v835
        %v869 = vmul.f32 %v729, %v840
        %v870 = vmul.f32 %v730, %v845
        %v871 = vmul.f32 %v731, %v850
        %v872 = vpack.c.bf16 %v853, %v852
        %v873 = vpack.c.bf16 %v855, %v854
        %v874 = vpack.c.bf16 %v857, %v856
        %v875 = vpack.c.bf16 %v859, %v858
        %v876 = vpack.c.bf16 %v861, %v860
        %v877 = vpack.c.bf16 %v863, %v862
        %v878 = vpack.c.bf16 %v865, %v864
        %v879 = vpack.c.bf16 %v867, %v866
        %v880 = vpack.c.bf16 %v869, %v868
        %v881 = vpack.c.bf16 %v871, %v870
        %v882 = vld [vmem:[%s2] sm:$0xff]
        %v883 = vld [vmem:[%s2 + $0x8] sm:$0xff]
        %v884 = vld [vmem:[%s2 + $0x10] sm:$0xff]
        %v885 = vld [vmem:[%s2 + $0x18] sm:$0xff]
        %v886 = vld [vmem:[%s2 + $0x20] sm:$0xff]
        %v887 = vld [vmem:[%s2 + $0x28] sm:$0xff]
        %v888 = vld [vmem:[%s2 + $0x30] sm:$0xff]
        %v889 = vld [vmem:[%s2 + $0x38] sm:$0xff]
        %v890 = vld [vmem:[%s2 + $0x40] sm:$0xff]
        %v891 = vld [vmem:[%s2 + $0x48] sm:$0xff]
        %v892 = vld [vmem:[%s2 + $0x50] sm:$0xff]
        %v893 = vld [vmem:[%s2 + $0x58] sm:$0xff]
        %v894 = vld [vmem:[%s2 + $0x60] sm:$0xff]
        %v895 = vld [vmem:[%s2 + $0x68] sm:$0xff]
        %v896 = vld [vmem:[%s2 + $0x70] sm:$0xff]
        %v897 = vld [vmem:[%s2 + $0x78] sm:$0xff]
        %v898 = vld [vmem:[%s2 + $0x80] sm:$0xff]
        %v899 = vld [vmem:[%s2 + $0x88] sm:$0xff]
        %v900 = vld [vmem:[%s2 + $0x90] sm:$0xff]
        %v901 = vld [vmem:[%s2 + $0x98] sm:$0xff]
        %903 = vset.pattern.permute.xlu0 0
        %904 = vperm.xlu0 %903, %v882
        %v905 = vpop.permute.xlu0 %904
        %908 = vset.pattern.permute.xlu0 0
        %909 = vperm.xlu0 %908, %v883
        %v910 = vpop.permute.xlu0 %909
        %913 = vset.pattern.permute.xlu0 0
        %914 = vperm.xlu0 %913, %v884
        %v915 = vpop.permute.xlu0 %914
        %918 = vset.pattern.permute.xlu0 0
        %919 = vperm.xlu0 %918, %v885
        %v920 = vpop.permute.xlu0 %919
        %923 = vset.pattern.permute.xlu0 0
        %924 = vperm.xlu0 %923, %v886
        %v925 = vpop.permute.xlu0 %924
        %928 = vset.pattern.permute.xlu0 0
        %929 = vperm.xlu0 %928, %v887
        %v930 = vpop.permute.xlu0 %929
        %933 = vset.pattern.permute.xlu0 0
        %934 = vperm.xlu0 %933, %v888
        %v935 = vpop.permute.xlu0 %934
        %938 = vset.pattern.permute.xlu0 0
        %939 = vperm.xlu0 %938, %v889
        %v940 = vpop.permute.xlu0 %939
        %943 = vset.pattern.permute.xlu0 0
        %944 = vperm.xlu0 %943, %v890
        %v945 = vpop.permute.xlu0 %944
        %948 = vset.pattern.permute.xlu0 0
        %949 = vperm.xlu0 %948, %v891
        %v950 = vpop.permute.xlu0 %949
        %953 = vset.pattern.permute.xlu0 0
        %954 = vperm.xlu0 %953, %v892
        %v955 = vpop.permute.xlu0 %954
        %958 = vset.pattern.permute.xlu0 0
        %959 = vperm.xlu0 %958, %v893
        %v960 = vpop.permute.xlu0 %959
        %963 = vset.pattern.permute.xlu0 0
        %964 = vperm.xlu0 %963, %v894
        %v965 = vpop.permute.xlu0 %964
        %968 = vset.pattern.permute.xlu0 0
        %969 = vperm.xlu0 %968, %v895
        %v970 = vpop.permute.xlu0 %969
        %973 = vset.pattern.permute.xlu0 0
        %974 = vperm.xlu0 %973, %v896
        %v975 = vpop.permute.xlu0 %974
        %978 = vset.pattern.permute.xlu0 0
        %979 = vperm.xlu0 %978, %v897
        %v980 = vpop.permute.xlu0 %979
        %983 = vset.pattern.permute.xlu0 0
        %984 = vperm.xlu0 %983, %v898
        %v985 = vpop.permute.xlu0 %984
        %988 = vset.pattern.permute.xlu0 0
        %989 = vperm.xlu0 %988, %v899
        %v990 = vpop.permute.xlu0 %989
        %993 = vset.pattern.permute.xlu0 0
        %994 = vperm.xlu0 %993, %v900
        %v995 = vpop.permute.xlu0 %994
        %998 = vset.pattern.permute.xlu0 0
        %999 = vperm.xlu0 %998, %v901
        %v1000 = vpop.permute.xlu0 %999
        %v1002 = vmul.f32 %v852, %v905
        %v1003 = vmul.f32 %v853, %v910
        %v1004 = vmul.f32 %v854, %v915
        %v1005 = vmul.f32 %v855, %v920
        %v1006 = vmul.f32 %v856, %v925
        %v1007 = vmul.f32 %v857, %v930
        %v1008 = vmul.f32 %v858, %v935
        %v1009 = vmul.f32 %v859, %v940
        %v1010 = vmul.f32 %v860, %v945
        %v1011 = vmul.f32 %v861, %v950
        %v1012 = vmul.f32 %v862, %v955
        %v1013 = vmul.f32 %v863, %v960
        %v1014 = vmul.f32 %v864, %v965
        %v1015 = vmul.f32 %v865, %v970
        %v1016 = vmul.f32 %v866, %v975
        %v1017 = vmul.f32 %v867, %v980
        %v1018 = vmul.f32 %v868, %v985
        %v1019 = vmul.f32 %v869, %v990
        %v1020 = vmul.f32 %v870, %v995
        %v1021 = vmul.f32 %v871, %v1000
        %v1022 = vrot.slane %v1002, 7
        %v1023 = vrot.slane %v1003, 7
        %v1024 = vrot.slane %v1004, 7
        %v1025 = vrot.slane %v1005, 7
        %v1026 = vrot.slane %v1006, 7
        %v1027 = vrot.slane %v1007, 7
        %v1028 = vrot.slane %v1008, 7
        %v1029 = vrot.slane %v1009, 7
        %v1030 = vrot.slane %v1010, 7
        %v1031 = vrot.slane %v1011, 7
        %v1032 = vrot.slane %v1012, 7
        %v1033 = vrot.slane %v1013, 7
        %v1034 = vrot.slane %v1014, 7
        %v1035 = vrot.slane %v1015, 7
        %v1036 = vrot.slane %v1016, 7
        %v1037 = vrot.slane %v1017, 7
        %v1038 = vrot.slane %v1018, 7
        %v1039 = vrot.slane %v1019, 7
        %v1040 = vrot.slane %v1020, 7
        %v1041 = vrot.slane %v1021, 7
        %v1042 = vlaneseq
        %v1043 = vshrl.u32 %v1042, 7
        %vm1044 = vcmp.lt.s32.totalorder %v1043, 1
        %v1045 = vsel %vm1044, %v1040, %v1041
        %v1046 = vsel %vm1044, %v1039, %v1040
        %v1047 = vsel %vm1044, %v1038, %v1039
        %v1048 = vsel %vm1044, %v1037, %v1038
        %v1049 = vsel %vm1044, %v1036, %v1037
        %v1050 = vsel %vm1044, %v1035, %v1036
        %v1051 = vsel %vm1044, %v1034, %v1035
        %v1052 = vsel %vm1044, %v1033, %v1034
        %v1053 = vsel %vm1044, %v1032, %v1033
        %v1054 = vsel %vm1044, %v1031, %v1032
        %v1055 = vsel %vm1044, %v1030, %v1031
        %v1056 = vsel %vm1044, %v1029, %v1030
        %v1057 = vsel %vm1044, %v1028, %v1029
        %v1058 = vsel %vm1044, %v1027, %v1028
        %v1059 = vsel %vm1044, %v1026, %v1027
        %v1060 = vsel %vm1044, %v1025, %v1026
        %v1061 = vsel %vm1044, %v1024, %v1025
        %v1062 = vsel %vm1044, %v1023, %v1024
        %v1063 = vsel %vm1044, %v1022, %v1023
        %v1064 = vsel %vm1044, %v1041, %v1022
        %v1065 = vpack.c.bf16 %v1063, %v1064
        %v1066 = vpack.c.bf16 %v1061, %v1062
        %v1067 = vpack.c.bf16 %v1059, %v1060
        %v1068 = vpack.c.bf16 %v1057, %v1058
        %v1069 = vpack.c.bf16 %v1055, %v1056
        %v1070 = vpack.c.bf16 %v1053, %v1054
        %v1071 = vpack.c.bf16 %v1051, %v1052
        %v1072 = vpack.c.bf16 %v1049, %v1050
        %v1073 = vpack.c.bf16 %v1047, %v1048
        %v1074 = vpack.c.bf16 %v1045, %v1046
        %v1075 = vld [vmem:[%s3] sm:$0xff]
        %v1076 = vld [vmem:[%s3 + $0x8] sm:$0xff]
        %v1077 = vld [vmem:[%s3 + $0x10] sm:$0xff]
        %v1078 = vld [vmem:[%s3 + $0x18] sm:$0xff]
        %v1079 = vld [vmem:[%s3 + $0x20] sm:$0xff]
        %v1080 = vld [vmem:[%s3 + $0x28] sm:$0xff]
        %v1081 = vld [vmem:[%s3 + $0x30] sm:$0xff]
        %v1082 = vld [vmem:[%s3 + $0x38] sm:$0xff]
        %v1083 = vld [vmem:[%s3 + $0x40] sm:$0xff]
        %v1084 = vld [vmem:[%s3 + $0x48] sm:$0xff]
        %v1085 = vld [vmem:[%s3 + $0x50] sm:$0xff]
        %v1086 = vld [vmem:[%s3 + $0x58] sm:$0xff]
        %v1087 = vld [vmem:[%s3 + $0x60] sm:$0xff]
        %v1088 = vld [vmem:[%s3 + $0x68] sm:$0xff]
        %v1089 = vld [vmem:[%s3 + $0x70] sm:$0xff]
        %v1090 = vld [vmem:[%s3 + $0x78] sm:$0xff]
        %v1091 = vld [vmem:[%s3 + $0x80] sm:$0xff]
        %v1092 = vld [vmem:[%s3 + $0x88] sm:$0xff]
        %v1093 = vld [vmem:[%s3 + $0x90] sm:$0xff]
        %v1094 = vld [vmem:[%s3 + $0x98] sm:$0xff]
        %1096 = vset.pattern.permute.xlu0 0
        %1097 = vperm.xlu0 %1096, %v1075
        %v1098 = vpop.permute.xlu0 %1097
        %1101 = vset.pattern.permute.xlu0 0
        %1102 = vperm.xlu0 %1101, %v1076
        %v1103 = vpop.permute.xlu0 %1102
        %1106 = vset.pattern.permute.xlu0 0
        %1107 = vperm.xlu0 %1106, %v1077
        %v1108 = vpop.permute.xlu0 %1107
        %1111 = vset.pattern.permute.xlu0 0
        %1112 = vperm.xlu0 %1111, %v1078
        %v1113 = vpop.permute.xlu0 %1112
        %1116 = vset.pattern.permute.xlu0 0
        %1117 = vperm.xlu0 %1116, %v1079
        %v1118 = vpop.permute.xlu0 %1117
        %1121 = vset.pattern.permute.xlu0 0
        %1122 = vperm.xlu0 %1121, %v1080
        %v1123 = vpop.permute.xlu0 %1122
        %1126 = vset.pattern.permute.xlu0 0
        %1127 = vperm.xlu0 %1126, %v1081
        %v1128 = vpop.permute.xlu0 %1127
        %1131 = vset.pattern.permute.xlu0 0
        %1132 = vperm.xlu0 %1131, %v1082
        %v1133 = vpop.permute.xlu0 %1132
        %1136 = vset.pattern.permute.xlu0 0
        %1137 = vperm.xlu0 %1136, %v1083
        %v1138 = vpop.permute.xlu0 %1137
        %1141 = vset.pattern.permute.xlu0 0
        %1142 = vperm.xlu0 %1141, %v1084
        %v1143 = vpop.permute.xlu0 %1142
        %1146 = vset.pattern.permute.xlu0 0
        %1147 = vperm.xlu0 %1146, %v1085
        %v1148 = vpop.permute.xlu0 %1147
        %1151 = vset.pattern.permute.xlu0 0
        %1152 = vperm.xlu0 %1151, %v1086
        %v1153 = vpop.permute.xlu0 %1152
        %1156 = vset.pattern.permute.xlu0 0
        %1157 = vperm.xlu0 %1156, %v1087
        %v1158 = vpop.permute.xlu0 %1157
        %1161 = vset.pattern.permute.xlu0 0
        %1162 = vperm.xlu0 %1161, %v1088
        %v1163 = vpop.permute.xlu0 %1162
        %1166 = vset.pattern.permute.xlu0 0
        %1167 = vperm.xlu0 %1166, %v1089
        %v1168 = vpop.permute.xlu0 %1167
        %1171 = vset.pattern.permute.xlu0 0
        %1172 = vperm.xlu0 %1171, %v1090
        %v1173 = vpop.permute.xlu0 %1172
        %1176 = vset.pattern.permute.xlu0 0
        %1177 = vperm.xlu0 %1176, %v1091
        %v1178 = vpop.permute.xlu0 %1177
        %1181 = vset.pattern.permute.xlu0 0
        %1182 = vperm.xlu0 %1181, %v1092
        %v1183 = vpop.permute.xlu0 %1182
        %1186 = vset.pattern.permute.xlu0 0
        %1187 = vperm.xlu0 %1186, %v1093
        %v1188 = vpop.permute.xlu0 %1187
        %1191 = vset.pattern.permute.xlu0 0
        %1192 = vperm.xlu0 %1191, %v1094
        %v1193 = vpop.permute.xlu0 %1192
        %v1195 = vmul.f32 %v852, %v1098
        %v1196 = vmul.f32 %v853, %v1103
        %v1197 = vmul.f32 %v854, %v1108
        %v1198 = vmul.f32 %v855, %v1113
        %v1199 = vmul.f32 %v856, %v1118
        %v1200 = vmul.f32 %v857, %v1123
        %v1201 = vmul.f32 %v858, %v1128
        %v1202 = vmul.f32 %v859, %v1133
        %v1203 = vmul.f32 %v860, %v1138
        %v1204 = vmul.f32 %v861, %v1143
        %v1205 = vmul.f32 %v862, %v1148
        %v1206 = vmul.f32 %v863, %v1153
        %v1207 = vmul.f32 %v864, %v1158
        %v1208 = vmul.f32 %v865, %v1163
        %v1209 = vmul.f32 %v866, %v1168
        %v1210 = vmul.f32 %v867, %v1173
        %v1211 = vmul.f32 %v868, %v1178
        %v1212 = vmul.f32 %v869, %v1183
        %v1213 = vmul.f32 %v870, %v1188
        %v1214 = vmul.f32 %v871, %v1193
        %v1215 = vrot.slane %v1195, 1
        %v1216 = vrot.slane %v1196, 1
        %v1217 = vrot.slane %v1197, 1
        %v1218 = vrot.slane %v1198, 1
        %v1219 = vrot.slane %v1199, 1
        %v1220 = vrot.slane %v1200, 1
        %v1221 = vrot.slane %v1201, 1
        %v1222 = vrot.slane %v1202, 1
        %v1223 = vrot.slane %v1203, 1
        %v1224 = vrot.slane %v1204, 1
        %v1225 = vrot.slane %v1205, 1
        %v1226 = vrot.slane %v1206, 1
        %v1227 = vrot.slane %v1207, 1
        %v1228 = vrot.slane %v1208, 1
        %v1229 = vrot.slane %v1209, 1
        %v1230 = vrot.slane %v1210, 1
        %v1231 = vrot.slane %v1211, 1
        %v1232 = vrot.slane %v1212, 1
        %v1233 = vrot.slane %v1213, 1
        %v1234 = vrot.slane %v1214, 1
        %vm1235 = vcmp.lt.s32.totalorder %v1043, 7
        %v1236 = vsel %vm1235, %v1233, %v1234
        %v1237 = vsel %vm1235, %v1232, %v1233
        %v1238 = vsel %vm1235, %v1231, %v1232
        %v1239 = vsel %vm1235, %v1230, %v1231
        %v1240 = vsel %vm1235, %v1229, %v1230
        %v1241 = vsel %vm1235, %v1228, %v1229
        %v1242 = vsel %vm1235, %v1227, %v1228
        %v1243 = vsel %vm1235, %v1226, %v1227
        %v1244 = vsel %vm1235, %v1225, %v1226
        %v1245 = vsel %vm1235, %v1224, %v1225
        %v1246 = vsel %vm1235, %v1223, %v1224
        %v1247 = vsel %vm1235, %v1222, %v1223
        %v1248 = vsel %vm1235, %v1221, %v1222
        %v1249 = vsel %vm1235, %v1220, %v1221
        %v1250 = vsel %vm1235, %v1219, %v1220
        %v1251 = vsel %vm1235, %v1218, %v1219
        %v1252 = vsel %vm1235, %v1217, %v1218
        %v1253 = vsel %vm1235, %v1216, %v1217
        %v1254 = vsel %vm1235, %v1215, %v1216
        %v1255 = vsel %vm1235, %v1234, %v1215
        %v1256 = vpack.c.bf16 %v1253, %v1254
        %v1257 = vpack.c.bf16 %v1251, %v1252
        %v1258 = vpack.c.bf16 %v1249, %v1250
        %v1259 = vpack.c.bf16 %v1247, %v1248
        %v1260 = vpack.c.bf16 %v1245, %v1246
        %v1261 = vpack.c.bf16 %v1243, %v1244
        %v1262 = vpack.c.bf16 %v1241, %v1242
        %v1263 = vpack.c.bf16 %v1239, %v1240
        %v1264 = vpack.c.bf16 %v1237, %v1238
        %v1265 = vpack.c.bf16 %v1255, %v1236
        %v1266 = vld [vmem:[#allocation4] sm:$0xf]
        %v1267 = vld [vmem:[#allocation4 + $0x4] sm:$0xf]
        %v1268 = vld [vmem:[#allocation4 + $0x8] sm:$0xf]
        %v1269 = vld [vmem:[#allocation4 + $0xc] sm:$0xf]
        %v1270 = vld [vmem:[#allocation4 + $0x10] sm:$0xf]
        %v1271 = vld [vmem:[#allocation4 + $0x14] sm:$0xf]
        %v1272 = vld [vmem:[#allocation4 + $0x18] sm:$0xf]
        %v1273 = vld [vmem:[#allocation4 + $0x1c] sm:$0xf]
        %v1274 = vld [vmem:[#allocation4 + $0x20] sm:$0xf]
        %v1275 = vld [vmem:[#allocation4 + $0x24] sm:$0xf]
        %v1276 = vld [vmem:[#allocation4 + $0x28] sm:$0xf]
        %v1277 = vld [vmem:[#allocation4 + $0x2c] sm:$0xf]
        %v1278 = vld [vmem:[#allocation4 + $0x30] sm:$0xf]
        %v1279 = vld [vmem:[#allocation4 + $0x34] sm:$0xf]
        %v1280 = vld [vmem:[#allocation4 + $0x38] sm:$0xf]
        %v1281 = vld [vmem:[#allocation4 + $0x3c] sm:$0xf]
        %v1282 = vld [vmem:[#allocation4 + $0x40] sm:$0xf]
        %v1283 = vld [vmem:[#allocation4 + $0x44] sm:$0xf]
        %v1284 = vld [vmem:[#allocation4 + $0x48] sm:$0xf]
        %v1285 = vld [vmem:[#allocation4 + $0x4c] sm:$0xf]
        %v1286 = vld [vmem:[#allocation4 + $0x50] sm:$0xf]
        %v1287 = vld [vmem:[#allocation4 + $0x54] sm:$0xf]
        %v1288 = vld [vmem:[#allocation4 + $0x58] sm:$0xf]
        %v1289 = vld [vmem:[#allocation4 + $0x5c] sm:$0xf]
        %v1290 = vld [vmem:[#allocation4 + $0x60] sm:$0xf]
        %v1291 = vld [vmem:[#allocation4 + $0x64] sm:$0xf]
        %v1292 = vld [vmem:[#allocation4 + $0x68] sm:$0xf]
        %v1293 = vld [vmem:[#allocation4 + $0x6c] sm:$0xf]
        %v1294 = vld [vmem:[#allocation4 + $0x70] sm:$0xf]
        %v1295 = vld [vmem:[#allocation4 + $0x74] sm:$0xf]
        %v1296 = vld [vmem:[#allocation4 + $0x78] sm:$0xf]
        %v1297 = vld [vmem:[#allocation4 + $0x7c] sm:$0xf]
        %v1298 = vld [vmem:[#allocation4 + $0x80] sm:$0xf]
        %v1299 = vld [vmem:[#allocation4 + $0x84] sm:$0xf]
        %v1300 = vld [vmem:[#allocation4 + $0x88] sm:$0xf]
        %v1301 = vld [vmem:[#allocation4 + $0x8c] sm:$0xf]
        %v1302 = vld [vmem:[#allocation4 + $0x90] sm:$0xf]
        %v1303 = vld [vmem:[#allocation4 + $0x94] sm:$0xf]
        %v1304 = vld [vmem:[#allocation4 + $0x98] sm:$0xf]
        %v1305 = vld [vmem:[#allocation4 + $0x9c] sm:$0xf]
        %v1306 = vld [vmem:[#allocation4 + $0xa0] sm:$0xf]
        %v1307 = vld [vmem:[#allocation4 + $0xa4] sm:$0xf]
        %v1308 = vld [vmem:[#allocation4 + $0xa8] sm:$0xf]
        %v1309 = vld [vmem:[#allocation4 + $0xac] sm:$0xf]
        %v1310 = vld [vmem:[#allocation4 + $0xb0] sm:$0xf]
        %v1311 = vld [vmem:[#allocation4 + $0xb4] sm:$0xf]
        %v1312 = vld [vmem:[#allocation4 + $0xb8] sm:$0xf]
        %v1313 = vld [vmem:[#allocation4 + $0xbc] sm:$0xf]
        %v1314 = vld [vmem:[#allocation4 + $0xc0] sm:$0xf]
        %v1315 = vld [vmem:[#allocation4 + $0xc4] sm:$0xf]
        %v1316 = vld [vmem:[#allocation4 + $0xc8] sm:$0xf]
        %v1317 = vld [vmem:[#allocation4 + $0xcc] sm:$0xf]
        %v1318 = vld [vmem:[#allocation4 + $0xd0] sm:$0xf]
        %v1319 = vld [vmem:[#allocation4 + $0xd4] sm:$0xf]
        %v1320 = vld [vmem:[#allocation4 + $0xd8] sm:$0xf]
        %v1321 = vld [vmem:[#allocation4 + $0xdc] sm:$0xf]
        %v1322 = vld [vmem:[#allocation4 + $0xe0] sm:$0xf]
        %v1323 = vld [vmem:[#allocation4 + $0xe4] sm:$0xf]
        %v1324 = vld [vmem:[#allocation4 + $0xe8] sm:$0xf]
        %v1325 = vld [vmem:[#allocation4 + $0xec] sm:$0xf]
        %v1326 = vld [vmem:[#allocation4 + $0xf0] sm:$0xf]
        %v1327 = vld [vmem:[#allocation4 + $0xf4] sm:$0xf]
        %v1328 = vld [vmem:[#allocation4 + $0xf8] sm:$0xf]
        %v1329 = vld [vmem:[#allocation4 + $0xfc] sm:$0xf]
        %v1330 = vld [vmem:[#allocation4 + $0x100] sm:$0xf]
        %v1331 = vld [vmem:[#allocation4 + $0x104] sm:$0xf]
        %v1332 = vld [vmem:[#allocation4 + $0x108] sm:$0xf]
        %v1333 = vld [vmem:[#allocation4 + $0x10c] sm:$0xf]
        %v1334 = vld [vmem:[#allocation4 + $0x110] sm:$0xf]
        %v1335 = vld [vmem:[#allocation4 + $0x114] sm:$0xf]
        %v1336 = vld [vmem:[#allocation4 + $0x118] sm:$0xf]
        %v1337 = vld [vmem:[#allocation4 + $0x11c] sm:$0xf]
        %v1338 = vld [vmem:[#allocation4 + $0x120] sm:$0xf]
        %v1339 = vld [vmem:[#allocation4 + $0x124] sm:$0xf]
        %v1340 = vld [vmem:[#allocation4 + $0x128] sm:$0xf]
        %v1341 = vld [vmem:[#allocation4 + $0x12c] sm:$0xf]
        %v1342 = vld [vmem:[#allocation4 + $0x130] sm:$0xf]
        %v1343 = vld [vmem:[#allocation4 + $0x134] sm:$0xf]
        %v1344 = vld [vmem:[#allocation4 + $0x138] sm:$0xf]
        %v1345 = vld [vmem:[#allocation4 + $0x13c] sm:$0xf]
        %v1346 = vld [vmem:[#allocation4 + $0x140] sm:$0xf]
        %v1347 = vld [vmem:[#allocation4 + $0x144] sm:$0xf]
        %v1348 = vld [vmem:[#allocation4 + $0x148] sm:$0xf]
        %v1349 = vld [vmem:[#allocation4 + $0x14c] sm:$0xf]
        %v1350 = vld [vmem:[#allocation4 + $0x150] sm:$0xf]
        %v1351 = vld [vmem:[#allocation4 + $0x154] sm:$0xf]
        %v1352 = vld [vmem:[#allocation4 + $0x158] sm:$0xf]
        %v1353 = vld [vmem:[#allocation4 + $0x15c] sm:$0xf]
        %v1354 = vld [vmem:[#allocation4 + $0x160] sm:$0xf]
        %v1355 = vld [vmem:[#allocation4 + $0x164] sm:$0xf]
        %v1356 = vld [vmem:[#allocation4 + $0x168] sm:$0xf]
        %v1357 = vld [vmem:[#allocation4 + $0x16c] sm:$0xf]
        %v1358 = vld [vmem:[#allocation4 + $0x170] sm:$0xf]
        %v1359 = vld [vmem:[#allocation4 + $0x174] sm:$0xf]
        %v1360 = vld [vmem:[#allocation4 + $0x178] sm:$0xf]
        %v1361 = vld [vmem:[#allocation4 + $0x17c] sm:$0xf]
        %v1410 = vunpack.c.l.b16 %v1314
        %v1411 = vunpack.c.l.b16 %v1315
        %v1412 = vunpack.c.l.b16 %v1316
        %v1413 = vunpack.c.l.b16 %v1317
        %v1414 = vunpack.c.l.b16 %v1318
        %v1415 = vunpack.c.l.b16 %v1319
        %v1416 = vunpack.c.l.b16 %v1320
        %v1417 = vunpack.c.l.b16 %v1321
        %v1418 = vunpack.c.l.b16 %v1322
        %v1419 = vunpack.c.l.b16 %v1323
        %v1420 = vunpack.c.l.b16 %v1324
        %v1421 = vunpack.c.l.b16 %v1325
        %v1422 = vunpack.c.l.b16 %v1326
        %v1423 = vunpack.c.l.b16 %v1327
        %v1424 = vunpack.c.l.b16 %v1328
        %v1425 = vunpack.c.l.b16 %v1329
        %v1426 = vunpack.c.l.b16 %v1330
        %v1427 = vunpack.c.l.b16 %v1331
        %v1428 = vunpack.c.l.b16 %v1332
        %v1429 = vunpack.c.l.b16 %v1333
        %v1430 = vunpack.c.l.b16 %v1334
        %v1431 = vunpack.c.l.b16 %v1335
        %v1432 = vunpack.c.l.b16 %v1336
        %v1433 = vunpack.c.l.b16 %v1337
        %v1434 = vunpack.c.l.b16 %v1338
        %v1435 = vunpack.c.l.b16 %v1339
        %v1436 = vunpack.c.l.b16 %v1340
        %v1437 = vunpack.c.l.b16 %v1341
        %v1438 = vunpack.c.l.b16 %v1342
        %v1439 = vunpack.c.l.b16 %v1343
        %v1440 = vunpack.c.l.b16 %v1344
        %v1441 = vunpack.c.l.b16 %v1345
        %v1442 = vunpack.c.l.b16 %v1346
        %v1443 = vunpack.c.l.b16 %v1347
        %v1444 = vunpack.c.l.b16 %v1348
        %v1445 = vunpack.c.l.b16 %v1349
        %v1446 = vunpack.c.l.b16 %v1350
        %v1447 = vunpack.c.l.b16 %v1351
        %v1448 = vunpack.c.l.b16 %v1352
        %v1449 = vunpack.c.l.b16 %v1353
        %v1450 = vunpack.c.l.b16 %v1354
        %v1451 = vunpack.c.l.b16 %v1355
        %v1452 = vunpack.c.l.b16 %v1356
        %v1453 = vunpack.c.l.b16 %v1357
        %v1454 = vunpack.c.l.b16 %v1358
        %v1455 = vunpack.c.l.b16 %v1359
        %v1456 = vunpack.c.l.b16 %v1360
        %v1457 = vunpack.c.l.b16 %v1361
        %v1458 = vpack.c.b16 %v1411, %v1410
        %v1459 = vpack.c.b16 %v1413, %v1412
        %v1460 = vpack.c.b16 %v1415, %v1414
        %v1461 = vpack.c.b16 %v1417, %v1416
        %v1462 = vpack.c.b16 %v1419, %v1418
        %v1463 = vpack.c.b16 %v1421, %v1420
        %v1464 = vpack.c.b16 %v1423, %v1422
        %v1465 = vpack.c.b16 %v1425, %v1424
        %v1466 = vpack.c.b16 %v1427, %v1426
        %v1467 = vpack.c.b16 %v1429, %v1428
        %v1468 = vpack.c.b16 %v1431, %v1430
        %v1469 = vpack.c.b16 %v1433, %v1432
        %v1470 = vpack.c.b16 %v1435, %v1434
        %v1471 = vpack.c.b16 %v1437, %v1436
        %v1472 = vpack.c.b16 %v1439, %v1438
        %v1473 = vpack.c.b16 %v1441, %v1440
        %v1474 = vpack.c.b16 %v1443, %v1442
        %v1475 = vpack.c.b16 %v1445, %v1444
        %v1476 = vpack.c.b16 %v1447, %v1446
        %v1477 = vpack.c.b16 %v1449, %v1448
        %v1478 = vpack.c.b16 %v1451, %v1450
        %v1479 = vpack.c.b16 %v1453, %v1452
        %v1480 = vpack.c.b16 %v1455, %v1454
        %v1481 = vpack.c.b16 %v1457, %v1456
        %1506 = vmatprep.subr.bf16.mxu0 0
        %1507 = vmatpush1.bf16.msra.mxu0 %v1465
        %1508 = vmatprep.subr.bf16.mxu0 0
        %1509 = vmatpush1.bf16.msra.mxu0 %v1464
        %1510 = vmatprep.subr.bf16.mxu0 0
        %1511 = vmatpush1.bf16.msra.mxu0 %v1463
        %1512 = vmatprep.subr.bf16.mxu0 0
        %1513 = vmatpush1.bf16.msra.mxu0 %v1462
        %1514 = vmatprep.subr.bf16.mxu0 0
        %1515 = vmatpush1.bf16.msra.mxu0 %v1461
        %1516 = vmatprep.subr.bf16.mxu0 0
        %1517 = vmatpush1.bf16.msra.mxu0 %v1460
        %1518 = vmatprep.subr.bf16.mxu0 0
        %1519 = vmatpush1.bf16.msra.mxu0 %v1459
        %1520 = vmatprep.subr.bf16.mxu0 0
        %1521 = vmatpush1.bf16.msra.mxu0 %v1458
        %1522 = vmatprep.subr.bf16.mxu0 0
        %1523 = vmatpush2.bf16.msra.mxu0 %v1473
        %1524 = vmatprep.subr.bf16.mxu0 0
        %1525 = vmatpush2.bf16.msra.mxu0 %v1472
        %1526 = vmatprep.subr.bf16.mxu0 0
        %1527 = vmatpush2.bf16.msra.mxu0 %v1471
        %1528 = vmatprep.subr.bf16.mxu0 0
        %1529 = vmatpush2.bf16.msra.mxu0 %v1470
        %1530 = vmatprep.subr.bf16.mxu0 0
        %1531 = vmatpush2.bf16.msra.mxu0 %v1469
        %1532 = vmatprep.subr.bf16.mxu0 0
        %1533 = vmatpush2.bf16.msra.mxu0 %v1468
        %1534 = vmatprep.subr.bf16.mxu0 0
        %1535 = vmatpush2.bf16.msra.mxu0 %v1467
        %1536 = vmatprep.subr.bf16.mxu0 0
        %1537 = vmatpush2.bf16.msra.mxu0 %v1466
        %1538 = vmatprep.mubr.bf16.mxu0 %v873
        %1539 = vmatmul.mubr.bf16.gmra.mxu0 %v1066
        %v1540 = vpop.f32.mrf.mxu0
        %v1541 = vadd.f32 0.0, %v1540
        %v1542 = vpop.f32.mrf.mxu0
        %v1543 = vpop.f32.mrf.mxu0
        %v1544 = vadd.f32 0.0, %v1543
        %v1545 = vpop.f32.mrf.mxu0
        %1546 = vmatprep.mubr.bf16.mxu0 %v874
        %1547 = vmatmul.mubr.bf16.gmra.mxu0 %v1067
        %v1548 = vpop.f32.mrf.mxu0
        %v1549 = vadd.f32 0.0, %v1548
        %v1550 = vpop.f32.mrf.mxu0
        %v1551 = vpop.f32.mrf.mxu0
        %v1552 = vadd.f32 0.0, %v1551
        %v1553 = vpop.f32.mrf.mxu0
        %1554 = vmatprep.mubr.bf16.mxu0 %v875
        %1555 = vmatmul.mubr.bf16.gmra.mxu0 %v1068
        %v1556 = vpop.f32.mrf.mxu0
        %v1557 = vadd.f32 0.0, %v1556
        %v1558 = vpop.f32.mrf.mxu0
        %v1559 = vpop.f32.mrf.mxu0
        %v1560 = vadd.f32 0.0, %v1559
        %v1561 = vpop.f32.mrf.mxu0
        %1562 = vmatprep.mubr.bf16.mxu0 %v876
        %1563 = vmatmul.mubr.bf16.gmra.mxu0 %v1069
        %v1564 = vpop.f32.mrf.mxu0
        %v1565 = vadd.f32 0.0, %v1564
        %v1566 = vpop.f32.mrf.mxu0
        %v1567 = vpop.f32.mrf.mxu0
        %v1568 = vadd.f32 0.0, %v1567
        %v1569 = vpop.f32.mrf.mxu0
        %1570 = vmatprep.mubr.bf16.mxu0 %v877
        %1571 = vmatmul.mubr.bf16.gmra.mxu0 %v1070
        %v1572 = vpop.f32.mrf.mxu0
        %v1573 = vadd.f32 0.0, %v1572
        %v1574 = vpop.f32.mrf.mxu0
        %v1575 = vpop.f32.mrf.mxu0
        %v1576 = vadd.f32 0.0, %v1575
        %v1577 = vpop.f32.mrf.mxu0
        %1578 = vmatprep.mubr.bf16.mxu0 %v878
        %1579 = vmatmul.mubr.bf16.gmra.mxu0 %v1071
        %v1580 = vpop.f32.mrf.mxu0
        %v1581 = vadd.f32 0.0, %v1580
        %v1582 = vpop.f32.mrf.mxu0
        %v1583 = vpop.f32.mrf.mxu0
        %v1584 = vadd.f32 0.0, %v1583
        %v1585 = vpop.f32.mrf.mxu0
        %1586 = vmatprep.mubr.bf16.mxu0 %v879
        %1587 = vmatmul.mubr.bf16.gmra.mxu0 %v1072
        %v1588 = vpop.f32.mrf.mxu0
        %v1589 = vadd.f32 0.0, %v1588
        %v1590 = vpop.f32.mrf.mxu0
        %v1591 = vpop.f32.mrf.mxu0
        %v1592 = vadd.f32 0.0, %v1591
        %v1593 = vpop.f32.mrf.mxu0
        %1594 = vmatprep.mubr.bf16.mxu0 %v880
        %1595 = vmatmul.mubr.bf16.gmra.mxu0 %v1073
        %v1596 = vpop.f32.mrf.mxu0
        %v1597 = vadd.f32 0.0, %v1596
        %v1598 = vpop.f32.mrf.mxu0
        %v1599 = vpop.f32.mrf.mxu0
        %v1600 = vadd.f32 0.0, %v1599
        %v1601 = vpop.f32.mrf.mxu0
        %1602 = vdwg.mxu0
        %1603 = vmatprep.subr.bf16.mxu0 0
        %1604 = vmatpush1.bf16.msra.mxu0 %v1481
        %1605 = vmatprep.subr.bf16.mxu0 0
        %1606 = vmatpush1.bf16.msra.mxu0 %v1480
        %1607 = vmatprep.subr.bf16.mxu0 0
        %1608 = vmatpush1.bf16.msra.mxu0 %v1479
        %1609 = vmatprep.subr.bf16.mxu0 0
        %1610 = vmatpush1.bf16.msra.mxu0 %v1478
        %1611 = vmatprep.subr.bf16.mxu0 0
        %1612 = vmatpush1.bf16.msra.mxu0 %v1477
        %1613 = vmatprep.subr.bf16.mxu0 0
        %1614 = vmatpush1.bf16.msra.mxu0 %v1476
        %1615 = vmatprep.subr.bf16.mxu0 0
        %1616 = vmatpush1.bf16.msra.mxu0 %v1475
        %1617 = vmatprep.subr.bf16.mxu0 0
        %1618 = vmatpush1.bf16.msra.mxu0 %v1474
        %1619 = vmatprep.subr.bf16.mxu0 0
        %1620 = vmatpush2.bf16.msra.mxu0 0
        %1621 = vmatprep.subr.bf16.mxu0 0
        %1622 = vmatpush2.bf16.msra.mxu0 0
        %1623 = vmatprep.subr.bf16.mxu0 0
        %1624 = vmatpush2.bf16.msra.mxu0 0
        %1625 = vmatprep.subr.bf16.mxu0 0
        %1626 = vmatpush2.bf16.msra.mxu0 0
        %1627 = vmatprep.subr.bf16.mxu0 0
        %1628 = vmatpush2.bf16.msra.mxu0 0
        %1629 = vmatprep.subr.bf16.mxu0 0
        %1630 = vmatpush2.bf16.msra.mxu0 0
        %1631 = vmatprep.subr.bf16.mxu0 0
        %1632 = vmatpush2.bf16.msra.mxu0 0
        %1633 = vmatprep.subr.bf16.mxu0 0
        %1634 = vmatpush2.bf16.msra.mxu0 0
        %1635 = vmatprep.mubr.bf16.mxu0 0
        %1636 = vmatmul.mubr.bf16.gmra.mxu0 %v1257
        %v1637 = vpop.f32.mrf.mxu0
        %v1638 = vadd.f32 %v1541, %v1637
        %v1639 = vpop.f32.mrf.mxu0
        %v1640 = vpop.f32.mrf.mxu0
        %v1641 = vadd.f32 %v1544, %v1640
        %v1642 = vpop.f32.mrf.mxu0
        %1643 = vmatprep.mubr.bf16.mxu0 0
        %1644 = vmatmul.mubr.bf16.gmra.mxu0 %v1258
        %v1645 = vpop.f32.mrf.mxu0
        %v1646 = vadd.f32 %v1549, %v1645
        %v1647 = vpop.f32.mrf.mxu0
        %v1648 = vpop.f32.mrf.mxu0
        %v1649 = vadd.f32 %v1552, %v1648
        %v1650 = vpop.f32.mrf.mxu0
        %1651 = vmatprep.mubr.bf16.mxu0 0
        %1652 = vmatmul.mubr.bf16.gmra.mxu0 %v1259
        %v1653 = vpop.f32.mrf.mxu0
        %v1654 = vadd.f32 %v1557, %v1653
        %v1655 = vpop.f32.mrf.mxu0
        %v1656 = vpop.f32.mrf.mxu0
        %v1657 = vadd.f32 %v1560, %v1656
        %v1658 = vpop.f32.mrf.mxu0
        %1659 = vmatprep.mubr.bf16.mxu0 0
        %1660 = vmatmul.mubr.bf16.gmra.mxu0 %v1260
        %v1661 = vpop.f32.mrf.mxu0
        %v1662 = vadd.f32 %v1565, %v1661
        %v1663 = vpop.f32.mrf.mxu0
        %v1664 = vpop.f32.mrf.mxu0
        %v1665 = vadd.f32 %v1568, %v1664
        %v1666 = vpop.f32.mrf.mxu0
        %1667 = vmatprep.mubr.bf16.mxu0 0
        %1668 = vmatmul.mubr.bf16.gmra.mxu0 %v1261
        %v1669 = vpop.f32.mrf.mxu0
        %v1670 = vadd.f32 %v1573, %v1669
        %v1671 = vpop.f32.mrf.mxu0
        %v1672 = vpop.f32.mrf.mxu0
        %v1673 = vadd.f32 %v1576, %v1672
        %v1674 = vpop.f32.mrf.mxu0
        %1675 = vmatprep.mubr.bf16.mxu0 0
        %1676 = vmatmul.mubr.bf16.gmra.mxu0 %v1262
        %v1677 = vpop.f32.mrf.mxu0
        %v1678 = vadd.f32 %v1581, %v1677
        %v1679 = vpop.f32.mrf.mxu0
        %v1680 = vpop.f32.mrf.mxu0
        %v1681 = vadd.f32 %v1584, %v1680
        %v1682 = vpop.f32.mrf.mxu0
        %1683 = vmatprep.mubr.bf16.mxu0 0
        %1684 = vmatmul.mubr.bf16.gmra.mxu0 %v1263
        %v1685 = vpop.f32.mrf.mxu0
        %v1686 = vadd.f32 %v1589, %v1685
        %v1687 = vpop.f32.mrf.mxu0
        %v1688 = vpop.f32.mrf.mxu0
        %v1689 = vadd.f32 %v1592, %v1688
        %v1690 = vpop.f32.mrf.mxu0
        %1691 = vmatprep.mubr.bf16.mxu0 0
        %1692 = vmatmul.mubr.bf16.gmra.mxu0 %v1264
        %v1693 = vpop.f32.mrf.mxu0
        %v1694 = vadd.f32 %v1597, %v1693
        %v1695 = vpop.f32.mrf.mxu0
        %v1696 = vpop.f32.mrf.mxu0
        %v1697 = vadd.f32 %v1600, %v1696
        %v1698 = vpop.f32.mrf.mxu0
        %1699 = vdwg.mxu0
        %v1748 = vunpack.c.l.b16 %v1266
        %v1749 = vunpack.c.l.b16 %v1267
        %v1750 = vunpack.c.l.b16 %v1268
        %v1751 = vunpack.c.l.b16 %v1269
        %v1752 = vunpack.c.l.b16 %v1270
        %v1753 = vunpack.c.l.b16 %v1271
        %v1754 = vunpack.c.l.b16 %v1272
        %v1755 = vunpack.c.l.b16 %v1273
        %v1756 = vunpack.c.l.b16 %v1274
        %v1757 = vunpack.c.l.b16 %v1275
        %v1758 = vunpack.c.l.b16 %v1276
        %v1759 = vunpack.c.l.b16 %v1277
        %v1760 = vunpack.c.l.b16 %v1278
        %v1761 = vunpack.c.l.b16 %v1279
        %v1762 = vunpack.c.l.b16 %v1280
        %v1763 = vunpack.c.l.b16 %v1281
        %v1764 = vunpack.c.l.b16 %v1282
        %v1765 = vunpack.c.l.b16 %v1283
        %v1766 = vunpack.c.l.b16 %v1284
        %v1767 = vunpack.c.l.b16 %v1285
        %v1768 = vunpack.c.l.b16 %v1286
        %v1769 = vunpack.c.l.b16 %v1287
        %v1770 = vunpack.c.l.b16 %v1288
        %v1771 = vunpack.c.l.b16 %v1289
        %v1772 = vunpack.c.l.b16 %v1290
        %v1773 = vunpack.c.l.b16 %v1291
        %v1774 = vunpack.c.l.b16 %v1292
        %v1775 = vunpack.c.l.b16 %v1293
        %v1776 = vunpack.c.l.b16 %v1294
        %v1777 = vunpack.c.l.b16 %v1295
        %v1778 = vunpack.c.l.b16 %v1296
        %v1779 = vunpack.c.l.b16 %v1297
        %v1780 = vunpack.c.l.b16 %v1298
        %v1781 = vunpack.c.l.b16 %v1299
        %v1782 = vunpack.c.l.b16 %v1300
        %v1783 = vunpack.c.l.b16 %v1301
        %v1784 = vunpack.c.l.b16 %v1302
        %v1785 = vunpack.c.l.b16 %v1303
        %v1786 = vunpack.c.l.b16 %v1304
        %v1787 = vunpack.c.l.b16 %v1305
        %v1788 = vunpack.c.l.b16 %v1306
        %v1789 = vunpack.c.l.b16 %v1307
        %v1790 = vunpack.c.l.b16 %v1308
        %v1791 = vunpack.c.l.b16 %v1309
        %v1792 = vunpack.c.l.b16 %v1310
        %v1793 = vunpack.c.l.b16 %v1311
        %v1794 = vunpack.c.l.b16 %v1312
        %v1795 = vunpack.c.l.b16 %v1313
        %v1796 = vpack.c.b16 %v1749, %v1748
        %v1797 = vpack.c.b16 %v1751, %v1750
        %v1798 = vpack.c.b16 %v1753, %v1752
        %v1799 = vpack.c.b16 %v1755, %v1754
        %v1800 = vpack.c.b16 %v1757, %v1756
        %v1801 = vpack.c.b16 %v1759, %v1758
        %v1802 = vpack.c.b16 %v1761, %v1760
        %v1803 = vpack.c.b16 %v1763, %v1762
        %v1804 = vpack.c.b16 %v1765, %v1764
        %v1805 = vpack.c.b16 %v1767, %v1766
        %v1806 = vpack.c.b16 %v1769, %v1768
        %v1807 = vpack.c.b16 %v1771, %v1770
        %v1808 = vpack.c.b16 %v1773, %v1772
        %v1809 = vpack.c.b16 %v1775, %v1774
        %v1810 = vpack.c.b16 %v1777, %v1776
        %v1811 = vpack.c.b16 %v1779, %v1778
        %v1812 = vpack.c.b16 %v1781, %v1780
        %v1813 = vpack.c.b16 %v1783, %v1782
        %v1814 = vpack.c.b16 %v1785, %v1784
        %v1815 = vpack.c.b16 %v1787, %v1786
        %v1816 = vpack.c.b16 %v1789, %v1788
        %v1817 = vpack.c.b16 %v1791, %v1790
        %v1818 = vpack.c.b16 %v1793, %v1792
        %v1819 = vpack.c.b16 %v1795, %v1794
        %1844 = vmatprep.subr.bf16.mxu0 0
        %1845 = vmatpush1.bf16.msra.mxu0 %v1803
        %1846 = vmatprep.subr.bf16.mxu0 0
        %1847 = vmatpush1.bf16.msra.mxu0 %v1802
        %1848 = vmatprep.subr.bf16.mxu0 0
        %1849 = vmatpush1.bf16.msra.mxu0 %v1801
        %1850 = vmatprep.subr.bf16.mxu0 0
        %1851 = vmatpush1.bf16.msra.mxu0 %v1800
        %1852 = vmatprep.subr.bf16.mxu0 0
        %1853 = vmatpush1.bf16.msra.mxu0 %v1799
        %1854 = vmatprep.subr.bf16.mxu0 0
        %1855 = vmatpush1.bf16.msra.mxu0 %v1798
        %1856 = vmatprep.subr.bf16.mxu0 0
        %1857 = vmatpush1.bf16.msra.mxu0 %v1797
        %1858 = vmatprep.subr.bf16.mxu0 0
        %1859 = vmatpush1.bf16.msra.mxu0 %v1796
        %1860 = vmatprep.subr.bf16.mxu0 0
        %1861 = vmatpush2.bf16.msra.mxu0 %v1811
        %1862 = vmatprep.subr.bf16.mxu0 0
        %1863 = vmatpush2.bf16.msra.mxu0 %v1810
        %1864 = vmatprep.subr.bf16.mxu0 0
        %1865 = vmatpush2.bf16.msra.mxu0 %v1809
        %1866 = vmatprep.subr.bf16.mxu0 0
        %1867 = vmatpush2.bf16.msra.mxu0 %v1808
        %1868 = vmatprep.subr.bf16.mxu0 0
        %1869 = vmatpush2.bf16.msra.mxu0 %v1807
        %1870 = vmatprep.subr.bf16.mxu0 0
        %1871 = vmatpush2.bf16.msra.mxu0 %v1806
        %1872 = vmatprep.subr.bf16.mxu0 0
        %1873 = vmatpush2.bf16.msra.mxu0 %v1805
        %1874 = vmatprep.subr.bf16.mxu0 0
        %1875 = vmatpush2.bf16.msra.mxu0 %v1804
        %1876 = vmatprep.mubr.bf16.mxu0 %v872
        %1877 = vmatmul.mubr.bf16.gmra.mxu0 %v1065
        %v1878 = vpop.f32.mrf.mxu0
        %v1879 = vadd.f32 %v1638, %v1878
        %v1880 = vpop.f32.mrf.mxu0
        %v1881 = vpop.f32.mrf.mxu0
        %v1882 = vadd.f32 %v1641, %v1881
        %v1883 = vpop.f32.mrf.mxu0
        %1884 = vmatprep.mubr.bf16.mxu0 %v873
        %1885 = vmatmul.mubr.bf16.gmra.mxu0 %v1066
        %v1886 = vpop.f32.mrf.mxu0
        %v1887 = vadd.f32 %v1646, %v1886
        %v1888 = vpop.f32.mrf.mxu0
        %v1889 = vpop.f32.mrf.mxu0
        %v1890 = vadd.f32 %v1649, %v1889
        %v1891 = vpop.f32.mrf.mxu0
        %1892 = vmatprep.mubr.bf16.mxu0 %v874
        %1893 = vmatmul.mubr.bf16.gmra.mxu0 %v1067
        %v1894 = vpop.f32.mrf.mxu0
        %v1895 = vadd.f32 %v1654, %v1894
        %v1896 = vpop.f32.mrf.mxu0
        %v1897 = vpop.f32.mrf.mxu0
        %v1898 = vadd.f32 %v1657, %v1897
        %v1899 = vpop.f32.mrf.mxu0
        %1900 = vmatprep.mubr.bf16.mxu0 %v875
        %1901 = vmatmul.mubr.bf16.gmra.mxu0 %v1068
        %v1902 = vpop.f32.mrf.mxu0
        %v1903 = vadd.f32 %v1662, %v1902
        %v1904 = vpop.f32.mrf.mxu0
        %v1905 = vpop.f32.mrf.mxu0
        %v1906 = vadd.f32 %v1665, %v1905
        %v1907 = vpop.f32.mrf.mxu0
        %1908 = vmatprep.mubr.bf16.mxu0 %v876
        %1909 = vmatmul.mubr.bf16.gmra.mxu0 %v1069
        %v1910 = vpop.f32.mrf.mxu0
        %v1911 = vadd.f32 %v1670, %v1910
        %v1912 = vpop.f32.mrf.mxu0
        %v1913 = vpop.f32.mrf.mxu0
        %v1914 = vadd.f32 %v1673, %v1913
        %v1915 = vpop.f32.mrf.mxu0
        %1916 = vmatprep.mubr.bf16.mxu0 %v877
        %1917 = vmatmul.mubr.bf16.gmra.mxu0 %v1070
        %v1918 = vpop.f32.mrf.mxu0
        %v1919 = vadd.f32 %v1678, %v1918
        %v1920 = vpop.f32.mrf.mxu0
        %v1921 = vpop.f32.mrf.mxu0
        %v1922 = vadd.f32 %v1681, %v1921
        %v1923 = vpop.f32.mrf.mxu0
        %1924 = vmatprep.mubr.bf16.mxu0 %v878
        %1925 = vmatmul.mubr.bf16.gmra.mxu0 %v1071
        %v1926 = vpop.f32.mrf.mxu0
        %v1927 = vadd.f32 %v1686, %v1926
        %v1928 = vpop.f32.mrf.mxu0
        %v1929 = vpop.f32.mrf.mxu0
        %v1930 = vadd.f32 %v1689, %v1929
        %v1931 = vpop.f32.mrf.mxu0
        %1932 = vmatprep.mubr.bf16.mxu0 %v879
        %1933 = vmatmul.mubr.bf16.gmra.mxu0 %v1072
        %v1934 = vpop.f32.mrf.mxu0
        %v1935 = vadd.f32 %v1694, %v1934
        %v1936 = vpop.f32.mrf.mxu0
        %v1937 = vpop.f32.mrf.mxu0
        %v1938 = vadd.f32 %v1697, %v1937
        %v1939 = vpop.f32.mrf.mxu0
        %1940 = vdwg.mxu0
        %1941 = vmatprep.subr.bf16.mxu0 0
        %1942 = vmatpush1.bf16.msra.mxu0 %v1819
        %1943 = vmatprep.subr.bf16.mxu0 0
        %1944 = vmatpush1.bf16.msra.mxu0 %v1818
        %1945 = vmatprep.subr.bf16.mxu0 0
        %1946 = vmatpush1.bf16.msra.mxu0 %v1817
        %1947 = vmatprep.subr.bf16.mxu0 0
        %1948 = vmatpush1.bf16.msra.mxu0 %v1816
        %1949 = vmatprep.subr.bf16.mxu0 0
        %1950 = vmatpush1.bf16.msra.mxu0 %v1815
        %1951 = vmatprep.subr.bf16.mxu0 0
        %1952 = vmatpush1.bf16.msra.mxu0 %v1814
        %1953 = vmatprep.subr.bf16.mxu0 0
        %1954 = vmatpush1.bf16.msra.mxu0 %v1813
        %1955 = vmatprep.subr.bf16.mxu0 0
        %1956 = vmatpush1.bf16.msra.mxu0 %v1812
        %1957 = vmatprep.subr.bf16.mxu0 0
        %1958 = vmatpush2.bf16.msra.mxu0 0
        %1959 = vmatprep.subr.bf16.mxu0 0
        %1960 = vmatpush2.bf16.msra.mxu0 0
        %1961 = vmatprep.subr.bf16.mxu0 0
        %1962 = vmatpush2.bf16.msra.mxu0 0
        %1963 = vmatprep.subr.bf16.mxu0 0
        %1964 = vmatpush2.bf16.msra.mxu0 0
        %1965 = vmatprep.subr.bf16.mxu0 0
        %1966 = vmatpush2.bf16.msra.mxu0 0
        %1967 = vmatprep.subr.bf16.mxu0 0
        %1968 = vmatpush2.bf16.msra.mxu0 0
        %1969 = vmatprep.subr.bf16.mxu0 0
        %1970 = vmatpush2.bf16.msra.mxu0 0
        %1971 = vmatprep.subr.bf16.mxu0 0
        %1972 = vmatpush2.bf16.msra.mxu0 0
        %1973 = vmatprep.mubr.bf16.mxu0 0
        %1974 = vmatmul.mubr.bf16.gmra.mxu0 %v1256
        %v1975 = vpop.f32.mrf.mxu0
        %v1976 = vadd.f32 %v1879, %v1975
        %v1977 = vpop.f32.mrf.mxu0
        %v1978 = vpop.f32.mrf.mxu0
        %v1979 = vadd.f32 %v1882, %v1978
        %v1980 = vpop.f32.mrf.mxu0
        %1981 = vmatprep.mubr.bf16.mxu0 0
        %1982 = vmatmul.mubr.bf16.gmra.mxu0 %v1257
        %v1983 = vpop.f32.mrf.mxu0
        %v1984 = vadd.f32 %v1887, %v1983
        %v1985 = vpop.f32.mrf.mxu0
        %v1986 = vpop.f32.mrf.mxu0
        %v1987 = vadd.f32 %v1890, %v1986
        %v1988 = vpop.f32.mrf.mxu0
        %1989 = vmatprep.mubr.bf16.mxu0 0
        %1990 = vmatmul.mubr.bf16.gmra.mxu0 %v1258
        %v1991 = vpop.f32.mrf.mxu0
        %v1992 = vadd.f32 %v1895, %v1991
        %v1993 = vpop.f32.mrf.mxu0
        %v1994 = vpop.f32.mrf.mxu0
        %v1995 = vadd.f32 %v1898, %v1994
        %v1996 = vpop.f32.mrf.mxu0
        %1997 = vmatprep.mubr.bf16.mxu0 0
        %1998 = vmatmul.mubr.bf16.gmra.mxu0 %v1259
        %v1999 = vpop.f32.mrf.mxu0
        %v2000 = vadd.f32 %v1903, %v1999
        %v2001 = vpop.f32.mrf.mxu0
        %v2002 = vpop.f32.mrf.mxu0
        %v2003 = vadd.f32 %v1906, %v2002
        %v2004 = vpop.f32.mrf.mxu0
        %2005 = vmatprep.mubr.bf16.mxu0 0
        %2006 = vmatmul.mubr.bf16.gmra.mxu0 %v1260
        %v2007 = vpop.f32.mrf.mxu0
        %v2008 = vadd.f32 %v1911, %v2007
        %v2009 = vpop.f32.mrf.mxu0
        %v2010 = vpop.f32.mrf.mxu0
        %v2011 = vadd.f32 %v1914, %v2010
        %v2012 = vpop.f32.mrf.mxu0
        %2013 = vmatprep.mubr.bf16.mxu0 0
        %2014 = vmatmul.mubr.bf16.gmra.mxu0 %v1261
        %v2015 = vpop.f32.mrf.mxu0
        %v2016 = vadd.f32 %v1919, %v2015
        %v2017 = vpop.f32.mrf.mxu0
        %v2018 = vpop.f32.mrf.mxu0
        %v2019 = vadd.f32 %v1922, %v2018
        %v2020 = vpop.f32.mrf.mxu0
        %2021 = vmatprep.mubr.bf16.mxu0 0
        %2022 = vmatmul.mubr.bf16.gmra.mxu0 %v1262
        %v2023 = vpop.f32.mrf.mxu0
        %v2024 = vadd.f32 %v1927, %v2023
        %v2025 = vpop.f32.mrf.mxu0
        %v2026 = vpop.f32.mrf.mxu0
        %v2027 = vadd.f32 %v1930, %v2026
        %v2028 = vpop.f32.mrf.mxu0
        %2029 = vmatprep.mubr.bf16.mxu0 0
        %2030 = vmatmul.mubr.bf16.gmra.mxu0 %v1263
        %v2031 = vpop.f32.mrf.mxu0
        %v2032 = vadd.f32 %v1935, %v2031
        %v2033 = vpop.f32.mrf.mxu0
        %v2034 = vpop.f32.mrf.mxu0
        %v2035 = vadd.f32 %v1938, %v2034
        %v2036 = vpop.f32.mrf.mxu0
        %2037 = vdwg.mxu0
        %v2038 = vld [vmem:[#allocation4 + $0x180] sm:$0xf]
        %v2039 = vld [vmem:[#allocation4 + $0x184] sm:$0xf]
        %v2040 = vld [vmem:[#allocation4 + $0x188] sm:$0xf]
        %v2041 = vld [vmem:[#allocation4 + $0x18c] sm:$0xf]
        %v2042 = vld [vmem:[#allocation4 + $0x190] sm:$0xf]
        %v2043 = vld [vmem:[#allocation4 + $0x194] sm:$0xf]
        %v2044 = vld [vmem:[#allocation4 + $0x198] sm:$0xf]
        %v2045 = vld [vmem:[#allocation4 + $0x19c] sm:$0xf]
        %v2046 = vld [vmem:[#allocation4 + $0x1a0] sm:$0xf]
        %v2047 = vld [vmem:[#allocation4 + $0x1a4] sm:$0xf]
        %v2048 = vld [vmem:[#allocation4 + $0x1a8] sm:$0xf]
        %v2049 = vld [vmem:[#allocation4 + $0x1ac] sm:$0xf]
        %v2050 = vld [vmem:[#allocation4 + $0x1b0] sm:$0xf]
        %v2051 = vld [vmem:[#allocation4 + $0x1b4] sm:$0xf]
        %v2052 = vld [vmem:[#allocation4 + $0x1b8] sm:$0xf]
        %v2053 = vld [vmem:[#allocation4 + $0x1bc] sm:$0xf]
        %v2054 = vld [vmem:[#allocation4 + $0x1c0] sm:$0xf]
        %v2055 = vld [vmem:[#allocation4 + $0x1c4] sm:$0xf]
        %v2056 = vld [vmem:[#allocation4 + $0x1c8] sm:$0xf]
        %v2057 = vld [vmem:[#allocation4 + $0x1cc] sm:$0xf]
        %v2058 = vld [vmem:[#allocation4 + $0x1d0] sm:$0xf]
        %v2059 = vld [vmem:[#allocation4 + $0x1d4] sm:$0xf]
        %v2060 = vld [vmem:[#allocation4 + $0x1d8] sm:$0xf]
        %v2061 = vld [vmem:[#allocation4 + $0x1dc] sm:$0xf]
        %v2062 = vld [vmem:[#allocation4 + $0x1e0] sm:$0xf]
        %v2063 = vld [vmem:[#allocation4 + $0x1e4] sm:$0xf]
        %v2064 = vld [vmem:[#allocation4 + $0x1e8] sm:$0xf]
        %v2065 = vld [vmem:[#allocation4 + $0x1ec] sm:$0xf]
        %v2066 = vld [vmem:[#allocation4 + $0x1f0] sm:$0xf]
        %v2067 = vld [vmem:[#allocation4 + $0x1f4] sm:$0xf]
        %v2068 = vld [vmem:[#allocation4 + $0x1f8] sm:$0xf]
        %v2069 = vld [vmem:[#allocation4 + $0x1fc] sm:$0xf]
        %v2070 = vld [vmem:[#allocation4 + $0x200] sm:$0xf]
        %v2071 = vld [vmem:[#allocation4 + $0x204] sm:$0xf]
        %v2072 = vld [vmem:[#allocation4 + $0x208] sm:$0xf]
        %v2073 = vld [vmem:[#allocation4 + $0x20c] sm:$0xf]
        %v2074 = vld [vmem:[#allocation4 + $0x210] sm:$0xf]
        %v2075 = vld [vmem:[#allocation4 + $0x214] sm:$0xf]
        %v2076 = vld [vmem:[#allocation4 + $0x218] sm:$0xf]
        %v2077 = vld [vmem:[#allocation4 + $0x21c] sm:$0xf]
        %v2078 = vld [vmem:[#allocation4 + $0x220] sm:$0xf]
        %v2079 = vld [vmem:[#allocation4 + $0x224] sm:$0xf]
        %v2080 = vld [vmem:[#allocation4 + $0x228] sm:$0xf]
        %v2081 = vld [vmem:[#allocation4 + $0x22c] sm:$0xf]
        %v2082 = vld [vmem:[#allocation4 + $0x230] sm:$0xf]
        %v2083 = vld [vmem:[#allocation4 + $0x234] sm:$0xf]
        %v2084 = vld [vmem:[#allocation4 + $0x238] sm:$0xf]
        %v2085 = vld [vmem:[#allocation4 + $0x23c] sm:$0xf]
        %v2134 = vunpack.c.l.b16 %v2038
        %v2135 = vunpack.c.l.b16 %v2039
        %v2136 = vunpack.c.l.b16 %v2040
        %v2137 = vunpack.c.l.b16 %v2041
        %v2138 = vunpack.c.l.b16 %v2042
        %v2139 = vunpack.c.l.b16 %v2043
        %v2140 = vunpack.c.l.b16 %v2044
        %v2141 = vunpack.c.l.b16 %v2045
        %v2142 = vunpack.c.l.b16 %v2046
        %v2143 = vunpack.c.l.b16 %v2047
        %v2144 = vunpack.c.l.b16 %v2048
        %v2145 = vunpack.c.l.b16 %v2049
        %v2146 = vunpack.c.l.b16 %v2050
        %v2147 = vunpack.c.l.b16 %v2051
        %v2148 = vunpack.c.l.b16 %v2052
        %v2149 = vunpack.c.l.b16 %v2053
        %v2150 = vunpack.c.l.b16 %v2054
        %v2151 = vunpack.c.l.b16 %v2055
        %v2152 = vunpack.c.l.b16 %v2056
        %v2153 = vunpack.c.l.b16 %v2057
        %v2154 = vunpack.c.l.b16 %v2058
        %v2155 = vunpack.c.l.b16 %v2059
        %v2156 = vunpack.c.l.b16 %v2060
        %v2157 = vunpack.c.l.b16 %v2061
        %v2158 = vunpack.c.l.b16 %v2062
        %v2159 = vunpack.c.l.b16 %v2063
        %v2160 = vunpack.c.l.b16 %v2064
        %v2161 = vunpack.c.l.b16 %v2065
        %v2162 = vunpack.c.l.b16 %v2066
        %v2163 = vunpack.c.l.b16 %v2067
        %v2164 = vunpack.c.l.b16 %v2068
        %v2165 = vunpack.c.l.b16 %v2069
        %v2166 = vunpack.c.l.b16 %v2070
        %v2167 = vunpack.c.l.b16 %v2071
        %v2168 = vunpack.c.l.b16 %v2072
        %v2169 = vunpack.c.l.b16 %v2073
        %v2170 = vunpack.c.l.b16 %v2074
        %v2171 = vunpack.c.l.b16 %v2075
        %v2172 = vunpack.c.l.b16 %v2076
        %v2173 = vunpack.c.l.b16 %v2077
        %v2174 = vunpack.c.l.b16 %v2078
        %v2175 = vunpack.c.l.b16 %v2079
        %v2176 = vunpack.c.l.b16 %v2080
        %v2177 = vunpack.c.l.b16 %v2081
        %v2178 = vunpack.c.l.b16 %v2082
        %v2179 = vunpack.c.l.b16 %v2083
        %v2180 = vunpack.c.l.b16 %v2084
        %v2181 = vunpack.c.l.b16 %v2085
        %v2182 = vpack.c.b16 %v2135, %v2134
        %v2183 = vpack.c.b16 %v2137, %v2136
        %v2184 = vpack.c.b16 %v2139, %v2138
        %v2185 = vpack.c.b16 %v2141, %v2140
        %v2186 = vpack.c.b16 %v2143, %v2142
        %v2187 = vpack.c.b16 %v2145, %v2144
        %v2188 = vpack.c.b16 %v2147, %v2146
        %v2189 = vpack.c.b16 %v2149, %v2148
        %v2190 = vpack.c.b16 %v2151, %v2150
        %v2191 = vpack.c.b16 %v2153, %v2152
        %v2192 = vpack.c.b16 %v2155, %v2154
        %v2193 = vpack.c.b16 %v2157, %v2156
        %v2194 = vpack.c.b16 %v2159, %v2158
        %v2195 = vpack.c.b16 %v2161, %v2160
        %v2196 = vpack.c.b16 %v2163, %v2162
        %v2197 = vpack.c.b16 %v2165, %v2164
        %v2198 = vpack.c.b16 %v2167, %v2166
        %v2199 = vpack.c.b16 %v2169, %v2168
        %v2200 = vpack.c.b16 %v2171, %v2170
        %v2201 = vpack.c.b16 %v2173, %v2172
        %v2202 = vpack.c.b16 %v2175, %v2174
        %v2203 = vpack.c.b16 %v2177, %v2176
        %v2204 = vpack.c.b16 %v2179, %v2178
        %v2205 = vpack.c.b16 %v2181, %v2180
        %2230 = vmatprep.subr.bf16.mxu0 0
        %2231 = vmatpush1.bf16.msra.mxu0 %v2189
        %2232 = vmatprep.subr.bf16.mxu0 0
        %2233 = vmatpush1.bf16.msra.mxu0 %v2188
        %2234 = vmatprep.subr.bf16.mxu0 0
        %2235 = vmatpush1.bf16.msra.mxu0 %v2187
        %2236 = vmatprep.subr.bf16.mxu0 0
        %2237 = vmatpush1.bf16.msra.mxu0 %v2186
        %2238 = vmatprep.subr.bf16.mxu0 0
        %2239 = vmatpush1.bf16.msra.mxu0 %v2185
        %2240 = vmatprep.subr.bf16.mxu0 0
        %2241 = vmatpush1.bf16.msra.mxu0 %v2184
        %2242 = vmatprep.subr.bf16.mxu0 0
        %2243 = vmatpush1.bf16.msra.mxu0 %v2183
        %2244 = vmatprep.subr.bf16.mxu0 0
        %2245 = vmatpush1.bf16.msra.mxu0 %v2182
        %2246 = vmatprep.subr.bf16.mxu0 0
        %2247 = vmatpush2.bf16.msra.mxu0 %v2197
        %2248 = vmatprep.subr.bf16.mxu0 0
        %2249 = vmatpush2.bf16.msra.mxu0 %v2196
        %2250 = vmatprep.subr.bf16.mxu0 0
        %2251 = vmatpush2.bf16.msra.mxu0 %v2195
        %2252 = vmatprep.subr.bf16.mxu0 0
        %2253 = vmatpush2.bf16.msra.mxu0 %v2194
        %2254 = vmatprep.subr.bf16.mxu0 0
        %2255 = vmatpush2.bf16.msra.mxu0 %v2193
        %2256 = vmatprep.subr.bf16.mxu0 0
        %2257 = vmatpush2.bf16.msra.mxu0 %v2192
        %2258 = vmatprep.subr.bf16.mxu0 0
        %2259 = vmatpush2.bf16.msra.mxu0 %v2191
        %2260 = vmatprep.subr.bf16.mxu0 0
        %2261 = vmatpush2.bf16.msra.mxu0 %v2190
        %2262 = vmatprep.mubr.bf16.mxu0 %v874
        %2263 = vmatmul.mubr.bf16.gmra.mxu0 %v1067
        %v2264 = vpop.f32.mrf.mxu0
        %v2265 = vadd.f32 0.0, %v2264
        %v2266 = vpop.f32.mrf.mxu0
        %v2267 = vpop.f32.mrf.mxu0
        %v2268 = vadd.f32 0.0, %v2267
        %v2269 = vpop.f32.mrf.mxu0
        %2270 = vmatprep.mubr.bf16.mxu0 %v875
        %2271 = vmatmul.mubr.bf16.gmra.mxu0 %v1068
        %v2272 = vpop.f32.mrf.mxu0
        %v2273 = vadd.f32 0.0, %v2272
        %v2274 = vpop.f32.mrf.mxu0
        %v2275 = vpop.f32.mrf.mxu0
        %v2276 = vadd.f32 0.0, %v2275
        %v2277 = vpop.f32.mrf.mxu0
        %2278 = vmatprep.mubr.bf16.mxu0 %v876
        %2279 = vmatmul.mubr.bf16.gmra.mxu0 %v1069
        %v2280 = vpop.f32.mrf.mxu0
        %v2281 = vadd.f32 0.0, %v2280
        %v2282 = vpop.f32.mrf.mxu0
        %v2283 = vpop.f32.mrf.mxu0
        %v2284 = vadd.f32 0.0, %v2283
        %v2285 = vpop.f32.mrf.mxu0
        %2286 = vmatprep.mubr.bf16.mxu0 %v877
        %2287 = vmatmul.mubr.bf16.gmra.mxu0 %v1070
        %v2288 = vpop.f32.mrf.mxu0
        %v2289 = vadd.f32 0.0, %v2288
        %v2290 = vpop.f32.mrf.mxu0
        %v2291 = vpop.f32.mrf.mxu0
        %v2292 = vadd.f32 0.0, %v2291
        %v2293 = vpop.f32.mrf.mxu0
        %2294 = vmatprep.mubr.bf16.mxu0 %v878
        %2295 = vmatmul.mubr.bf16.gmra.mxu0 %v1071
        %v2296 = vpop.f32.mrf.mxu0
        %v2297 = vadd.f32 0.0, %v2296
        %v2298 = vpop.f32.mrf.mxu0
        %v2299 = vpop.f32.mrf.mxu0
        %v2300 = vadd.f32 0.0, %v2299
        %v2301 = vpop.f32.mrf.mxu0
        %2302 = vmatprep.mubr.bf16.mxu0 %v879
        %2303 = vmatmul.mubr.bf16.gmra.mxu0 %v1072
        %v2304 = vpop.f32.mrf.mxu0
        %v2305 = vadd.f32 0.0, %v2304
        %v2306 = vpop.f32.mrf.mxu0
        %v2307 = vpop.f32.mrf.mxu0
        %v2308 = vadd.f32 0.0, %v2307
        %v2309 = vpop.f32.mrf.mxu0
        %2310 = vmatprep.mubr.bf16.mxu0 %v880
        %2311 = vmatmul.mubr.bf16.gmra.mxu0 %v1073
        %v2312 = vpop.f32.mrf.mxu0
        %v2313 = vadd.f32 0.0, %v2312
        %v2314 = vpop.f32.mrf.mxu0
        %v2315 = vpop.f32.mrf.mxu0
        %v2316 = vadd.f32 0.0, %v2315
        %v2317 = vpop.f32.mrf.mxu0
        %2318 = vmatprep.mubr.bf16.mxu0 %v881
        %2319 = vmatmul.mubr.bf16.gmra.mxu0 %v1074
        %v2320 = vpop.f32.mrf.mxu0
        %v2321 = vadd.f32 0.0, %v2320
        %v2322 = vpop.f32.mrf.mxu0
        %v2323 = vpop.f32.mrf.mxu0
        %v2324 = vadd.f32 0.0, %v2323
        %v2325 = vpop.f32.mrf.mxu0
        %2326 = vdwg.mxu0
        %2327 = vmatprep.subr.bf16.mxu0 0
        %2328 = vmatpush1.bf16.msra.mxu0 %v2205
        %2329 = vmatprep.subr.bf16.mxu0 0
        %2330 = vmatpush1.bf16.msra.mxu0 %v2204
        %2331 = vmatprep.subr.bf16.mxu0 0
        %2332 = vmatpush1.bf16.msra.mxu0 %v2203
        %2333 = vmatprep.subr.bf16.mxu0 0
        %2334 = vmatpush1.bf16.msra.mxu0 %v2202
        %2335 = vmatprep.subr.bf16.mxu0 0
        %2336 = vmatpush1.bf16.msra.mxu0 %v2201
        %2337 = vmatprep.subr.bf16.mxu0 0
        %2338 = vmatpush1.bf16.msra.mxu0 %v2200
        %2339 = vmatprep.subr.bf16.mxu0 0
        %2340 = vmatpush1.bf16.msra.mxu0 %v2199
        %2341 = vmatprep.subr.bf16.mxu0 0
        %2342 = vmatpush1.bf16.msra.mxu0 %v2198
        %2343 = vmatprep.subr.bf16.mxu0 0
        %2344 = vmatpush2.bf16.msra.mxu0 0
        %2345 = vmatprep.subr.bf16.mxu0 0
        %2346 = vmatpush2.bf16.msra.mxu0 0
        %2347 = vmatprep.subr.bf16.mxu0 0
        %2348 = vmatpush2.bf16.msra.mxu0 0
        %2349 = vmatprep.subr.bf16.mxu0 0
        %2350 = vmatpush2.bf16.msra.mxu0 0
        %2351 = vmatprep.subr.bf16.mxu0 0
        %2352 = vmatpush2.bf16.msra.mxu0 0
        %2353 = vmatprep.subr.bf16.mxu0 0
        %2354 = vmatpush2.bf16.msra.mxu0 0
        %2355 = vmatprep.subr.bf16.mxu0 0
        %2356 = vmatpush2.bf16.msra.mxu0 0
        %2357 = vmatprep.subr.bf16.mxu0 0
        %2358 = vmatpush2.bf16.msra.mxu0 0
        %2359 = vmatprep.mubr.bf16.mxu0 0
        %2360 = vmatmul.mubr.bf16.gmra.mxu0 %v1258
        %v2361 = vpop.f32.mrf.mxu0
        %v2362 = vadd.f32 %v2265, %v2361
        %v2363 = vpop.f32.mrf.mxu0
        %v2364 = vpop.f32.mrf.mxu0
        %v2365 = vadd.f32 %v2268, %v2364
        %v2366 = vpop.f32.mrf.mxu0
        %2367 = vmatprep.mubr.bf16.mxu0 0
        %2368 = vmatmul.mubr.bf16.gmra.mxu0 %v1259
        %v2369 = vpop.f32.mrf.mxu0
        %v2370 = vadd.f32 %v2273, %v2369
        %v2371 = vpop.f32.mrf.mxu0
        %v2372 = vpop.f32.mrf.mxu0
        %v2373 = vadd.f32 %v2276, %v2372
        %v2374 = vpop.f32.mrf.mxu0
        %2375 = vmatprep.mubr.bf16.mxu0 0
        %2376 = vmatmul.mubr.bf16.gmra.mxu0 %v1260
        %v2377 = vpop.f32.mrf.mxu0
        %v2378 = vadd.f32 %v2281, %v2377
        %v2379 = vpop.f32.mrf.mxu0
        %v2380 = vpop.f32.mrf.mxu0
        %v2381 = vadd.f32 %v2284, %v2380
        %v2382 = vpop.f32.mrf.mxu0
        %2383 = vmatprep.mubr.bf16.mxu0 0
        %2384 = vmatmul.mubr.bf16.gmra.mxu0 %v1261
        %v2385 = vpop.f32.mrf.mxu0
        %v2386 = vadd.f32 %v2289, %v2385
        %v2387 = vpop.f32.mrf.mxu0
        %v2388 = vpop.f32.mrf.mxu0
        %v2389 = vadd.f32 %v2292, %v2388
        %v2390 = vpop.f32.mrf.mxu0
        %2391 = vmatprep.mubr.bf16.mxu0 0
        %2392 = vmatmul.mubr.bf16.gmra.mxu0 %v1262
        %v2393 = vpop.f32.mrf.mxu0
        %v2394 = vadd.f32 %v2297, %v2393
        %v2395 = vpop.f32.mrf.mxu0
        %v2396 = vpop.f32.mrf.mxu0
        %v2397 = vadd.f32 %v2300, %v2396
        %v2398 = vpop.f32.mrf.mxu0
        %2399 = vmatprep.mubr.bf16.mxu0 0
        %2400 = vmatmul.mubr.bf16.gmra.mxu0 %v1263
        %v2401 = vpop.f32.mrf.mxu0
        %v2402 = vadd.f32 %v2305, %v2401
        %v2403 = vpop.f32.mrf.mxu0
        %v2404 = vpop.f32.mrf.mxu0
        %v2405 = vadd.f32 %v2308, %v2404
        %v2406 = vpop.f32.mrf.mxu0
        %2407 = vmatprep.mubr.bf16.mxu0 0
        %2408 = vmatmul.mubr.bf16.gmra.mxu0 %v1264
        %v2409 = vpop.f32.mrf.mxu0
        %v2410 = vadd.f32 %v2313, %v2409
        %v2411 = vpop.f32.mrf.mxu0
        %v2412 = vpop.f32.mrf.mxu0
        %v2413 = vadd.f32 %v2316, %v2412
        %v2414 = vpop.f32.mrf.mxu0
        %2415 = vmatprep.mubr.bf16.mxu0 0
        %2416 = vmatmul.mubr.bf16.gmra.mxu0 %v1265
        %v2417 = vpop.f32.mrf.mxu0
        %v2418 = vadd.f32 %v2321, %v2417
        %v2419 = vpop.f32.mrf.mxu0
        %v2420 = vpop.f32.mrf.mxu0
        %v2421 = vadd.f32 %v2324, %v2420
        %v2422 = vpop.f32.mrf.mxu0
        %2423 = vdwg.mxu0
        %v2424 = vadd.f32 %v1976, %v2362
        %v2425 = vadd.f32 %v1979, %v2365
        %v2426 = vadd.f32 %v1984, %v2370
        %v2427 = vadd.f32 %v1987, %v2373
        %v2428 = vadd.f32 %v1992, %v2378
        %v2429 = vadd.f32 %v1995, %v2381
        %v2430 = vadd.f32 %v2000, %v2386
        %v2431 = vadd.f32 %v2003, %v2389
        %v2432 = vadd.f32 %v2008, %v2394
        %v2433 = vadd.f32 %v2011, %v2397
        %v2434 = vadd.f32 %v2016, %v2402
        %v2435 = vadd.f32 %v2019, %v2405
        %v2436 = vadd.f32 %v2024, %v2410
        %v2437 = vadd.f32 %v2027, %v2413
        %v2438 = vadd.f32 %v2032, %v2418
        %v2439 = vadd.f32 %v2035, %v2421
        %v2440 = vld [vmem:[%s7] sm:$0x1]
        %v2442 = vlaneseq
        %v2443 = vshrl.u32 %v2442, 7
        %v2444 = vsub.s32 0, %v2443
        %v2445 = vrot.slane %v2440, %v2444
        %v2447 = vadd.f32 %v2424, %v2445
        %v2448 = vadd.f32 %v2425, %v2445
        %v2449 = vadd.f32 %v2426, %v2445
        %v2450 = vadd.f32 %v2427, %v2445
        %v2451 = vadd.f32 %v2428, %v2445
        %v2452 = vadd.f32 %v2429, %v2445
        %v2453 = vadd.f32 %v2430, %v2445
        %v2454 = vadd.f32 %v2431, %v2445
        %v2455 = vadd.f32 %v2432, %v2445
        %v2456 = vadd.f32 %v2433, %v2445
        %v2457 = vadd.f32 %v2434, %v2445
        %v2458 = vadd.f32 %v2435, %v2445
        %v2459 = vadd.f32 %v2436, %v2445
        %v2460 = vadd.f32 %v2437, %v2445
        %v2461 = vadd.f32 %v2438, %v2445
        %v2462 = vadd.f32 %v2439, %v2445
        %v2463 = vmax.f32 %v2447, 0.0
        %v2464 = vmax.f32 %v2448, 0.0
        %v2465 = vmax.f32 %v2449, 0.0
        %v2466 = vmax.f32 %v2450, 0.0
        %v2467 = vmax.f32 %v2451, 0.0
        %v2468 = vmax.f32 %v2452, 0.0
        %v2469 = vmax.f32 %v2453, 0.0
        %v2470 = vmax.f32 %v2454, 0.0
        %v2471 = vmax.f32 %v2455, 0.0
        %v2472 = vmax.f32 %v2456, 0.0
        %v2473 = vmax.f32 %v2457, 0.0
        %v2474 = vmax.f32 %v2458, 0.0
        %v2475 = vmax.f32 %v2459, 0.0
        %v2476 = vmax.f32 %v2460, 0.0
        %v2477 = vmax.f32 %v2461, 0.0
        %v2478 = vmax.f32 %v2462, 0.0
        %v2479 = vadd.f32 %v500, %v2463
        %v2480 = vadd.f32 %v501, %v2464
        %v2481 = vadd.f32 %v502, %v2465
        %v2482 = vadd.f32 %v503, %v2466
        %v2483 = vadd.f32 %v504, %v2467
        %v2484 = vadd.f32 %v505, %v2468
        %v2485 = vadd.f32 %v506, %v2469
        %v2486 = vadd.f32 %v507, %v2470
        %v2487 = vadd.f32 %v508, %v2471
        %v2488 = vadd.f32 %v509, %v2472
        %v2489 = vadd.f32 %v510, %v2473
        %v2490 = vadd.f32 %v511, %v2474
        %v2491 = vadd.f32 %v512, %v2475
        %v2492 = vadd.f32 %v513, %v2476
        %v2493 = vadd.f32 %v514, %v2477
        %v2494 = vadd.f32 %v515, %v2478
        %2495 = vst [vmem:[%s301] sm:$0xff] %v2479
        %2496 = vst [vmem:[%s301 + $0x8] sm:$0xff] %v2480
        %2497 = vst [vmem:[%s301 + $0x10] sm:$0xff] %v2481
        %2498 = vst [vmem:[%s301 + $0x18] sm:$0xff] %v2482
        %2499 = vst [vmem:[%s301 + $0x20] sm:$0xff] %v2483
        %2500 = vst [vmem:[%s301 + $0x28] sm:$0xff] %v2484
        %2501 = vst [vmem:[%s301 + $0x30] sm:$0xff] %v2485
        %2502 = vst [vmem:[%s301 + $0x38] sm:$0xff] %v2486
        %2503 = vst [vmem:[%s301 + $0x40] sm:$0xff] %v2487
        %2504 = vst [vmem:[%s301 + $0x48] sm:$0xff] %v2488
        %2505 = vst [vmem:[%s301 + $0x50] sm:$0xff] %v2489
        %2506 = vst [vmem:[%s301 + $0x58] sm:$0xff] %v2490
        %2507 = vst [vmem:[%s301 + $0x60] sm:$0xff] %v2491
        %2508 = vst [vmem:[%s301 + $0x68] sm:$0xff] %v2492
        %2509 = vst [vmem:[%s301 + $0x70] sm:$0xff] %v2493
        %2510 = vst [vmem:[%s301 + $0x78] sm:$0xff] %v2494
        %s2511 = sand.u32 %s197, 1
        %s2512 = scalar_lea.sflag [#allocation6], %s2511
        %s2513 = sand.u32 %s197, 1
        %s2514 = smul.addr %s2513, 128
        %s2515 = scalar_lea.vmem [#allocation7], %s2514
        // Predicated region
        $region129: #{tpu_custom_call.1} parent=47 // pred_check
          %p2516 = pneg %p207
        $region130: #{tpu_custom_call.1} parent=47 // pred_check_branch
          %2518 = sbr.rel (%p2516) target = $region132
        $region131: #{tpu_custom_call.1} parent=47 // pred_region
          %s2520 = ssub.s32 2048, 2048
          %2521 = vsyncadd %s2512, %s2520
          %s2522 = smul.addr %s28, 16
          %s2523 = smul.addr %s27, 32
          %s2524 = sadd.s32 %s2522, %s2523
          %s2525 = smul.addr %s2524, 128
          %s2526 = scalar_lea.hbm %s8, %s2525
          %s2527 = sshll.u32 %s2515, 4
          %s2528 = int_to_ptr.vmem [resolvable:$true] %s2527
          %2533 = dma.vmem_to_hbm [thread:$0]  %s2528, 2048, %s2526, %s2512, 128, 128, 8
        $region132: #{tpu_custom_call.1} parent=47 // pred_fallthru
          _
      $region48: #{tpu_custom_call.1} parent=5 // pred_fallthru
        _
      %p2534 = scmp.le.s32.totalorder 2, %s18
      // Predicated region
      $region133: #{tpu_custom_call.1} parent=5 // pred_check
        %p2535 = pneg %p2534
      $region134: #{tpu_custom_call.1} parent=5 // pred_check_branch
        %2537 = sbr.rel (%p2535) target = $region136
      $region135: #{tpu_custom_call.1} parent=5 // pred_region
        %s2538 = ssub.s32 %s18, 2
        // Predicated region
        $region137: #{tpu_custom_call.1} parent=135 // pred_check
          %p2539 = pneg %p213
        $region138: #{tpu_custom_call.1} parent=135 // pred_check_branch
          %2541 = sbr.rel (%p2539) target = $region140
        $region139: #{tpu_custom_call.1} parent=135 // pred_region
          %s2542 = sand.u32 %s198, 1
          %s2543 = scalar_lea.sflag [#allocation6], %s2542
          %s2544 = sand.u32 %s198, 1
          %s2545 = smul.addr %s2544, 128
          %s2546 = scalar_lea.vmem [#allocation7], %s2545
          %2547 = dma.done %s2543, 2048
        $region140: #{tpu_custom_call.1} parent=135 // pred_fallthru
          _
      $region136: #{tpu_custom_call.1} parent=5 // pred_fallthru
        _
    $region6: #{tpu_custom_call.1} parent=1 // loop_footer
      %s22 = sadd.s32 1, %s18
    $region7: #{tpu_custom_call.1} parent=1 // loop_footer_branch
      %17 = sbr.rel target = $region3
    $region8: #{tpu_custom_call.1} parent=1 // loop_exit
      _
    %2548 = vsyncpa [#allocation5], 1
    %s2549 = scalar_lea.sflag [#allocation5], 1
    %2550 = vsyncpa %s2549, 1
    %2551 = vsyncpa [#allocation6], 1
    %s2552 = scalar_lea.sflag [#allocation6], 1
    %2553 = vsyncpa %s2552, 1
  %2554 = vsyncmov [#allocation3]
  %s2555 = vpop.sfrf %2554
  %p2556 = scmp.eq.s32.totalorder %s2555, 0
  %p2557 = pneg %p2556
  %2559 = shalt.err (%p2557)
  %s2560 = scalar_lea.sflag [#allocation3], 1
  %2561 = vsyncmov %s2560
  %s2562 = vpop.sfrf %2561
  %p2563 = scmp.eq.s32.totalorder %s2562, 0
  %p2564 = pneg %p2563
  %2566 = shalt.err (%p2564)

</llo_original>
